<compile_context>
chip_gen: v7x
topology: tpu7x:2x2x1
jax: 0.10.0
libtpu: 0.0.40
codegen_flags: <defaults>
</compile_context>

<pallas_src>
import functools

import jax
import jax.numpy as jnp
from jax.experimental import pallas as pl
from jax.experimental.pallas import tpu as pltpu


def _cdiv(a, b):
    return (a + b - 1) // b


def _round_down_multiple(x, m):
    return max(m, (x // m) * m)


def _dense_conv1x1_kernel(w_ref, b_ref, x_ref, o_ref, *,
                          num_stages, blocks_per_stage, nb, sub_tl, n_sub):
    """One (batch-tile, L-tile) cell of the full stage/block stack.

    w_ref: (S*B, C, C)  folded conv+BN weights (constant block, VMEM resident)
    b_ref: (S*B, C, 1)  folded conv+BN biases (f32)
    x_ref: (nb, C, TL)  input tile
    o_ref: (nb, C, TL)  output tile
    """
    cdt = x_ref.dtype
    # Static (unrolled) loops over the batch sub-block and lane sub-chunks.
    # Each iteration ends with a store to o_ref, so only one (C, sub_tl)
    # working set (x / identity / y) is live at a time -> no vreg spills even
    # for large C, while the DMA tile (TL lanes) stays wide.
    for bi in range(nb):
        for si in range(n_sub):
            lo = si * sub_tl
            x = x_ref[bi, :, pl.ds(lo, sub_tl)]             # (C, sub_tl), activation dtype
            for s in range(num_stages):
                identity = x
                for j in range(blocks_per_stage):
                    k = s * blocks_per_stage + j
                    w = w_ref[k]                            # (C, C), static index
                    b = b_ref[k]                            # (C, 1), f32
                    # MXU matmul with f32 accumulation; operands stay narrow.
                    y = jnp.dot(w, x, preferred_element_type=jnp.float32) + b
                    x = jnp.maximum(y, 0.0).astype(cdt)     # ReLU
                # Residual add in f32, result back in activation dtype.
                x = (x.astype(jnp.float32)
                     + identity.astype(jnp.float32)).astype(cdt)
            o_ref[bi, :, pl.ds(lo, sub_tl)] = x.astype(o_ref.dtype)


def _vmem_budget_bytes(frac=0.75, fallback_capacity=64 << 20):
    """~75% of this chip's physical VMEM (48 MiB on v7x, 96 MiB on v5e/v6e)."""
    try:
        info = pltpu.get_tpu_info()
        cap = int(getattr(info, "vmem_capacity_bytes", 0) or 0)
        if cap > 0:
            return int(cap * frac)
    except Exception:
        pass
    return int(fallback_capacity * frac)


def _plan_tiling(n, c, l, elt, weight_bytes, vmem_budget):
    """Pick (nb, tl, sub_tl, n_sub) for the (nb, C, tl) activation blocks."""
    # (1) Lane sub-chunk: keep 3 live (C, sub_tl) f32 slabs within ~192 KiB
    #     (3/4 of the 256 KiB vreg file): sub_tl ~= 16384 / C, multiple of 128.
    sub_cap = _round_down_multiple(16384 // max(c, 1), 128)
    if l <= sub_cap:
        sub_tl, n_sub = l, 1            # full-extent L block (always legal)
    else:
        sub_tl = sub_cap
        # (2) DMA tile along L: a few sub-chunks, targeting ~2048 lanes for
        #     large, lane-dense transfers; never more sub-chunks than needed.
        n_sub = min(max(1, 2048 // sub_tl), _cdiv(l, sub_tl))
    tl = sub_tl * n_sub

    # (3) Batch blocking: aim for >= ~512 KiB of x per grid step so the
    #     ~0.35 us per-step overhead is amortized (small-C regime).
    per_batch_bytes = c * tl * elt
    nb = max(1, min(n, (512 * 1024) // max(per_batch_bytes, 1)))

    # (4) Keep at least 2 grid steps when possible so both v7x TensorCores get
    #     work (neutral on single-core v5e/v6e).
    if n >= 2 and _cdiv(n, nb) * _cdiv(l, tl) < 2:
        nb = max(1, _cdiv(n, 2))

    # (5) Shrink to fit the VMEM budget: weights (budget 2 buffers to be safe)
    #     + double-buffered x and out tiles + margin for Mosaic internals.
    def estimate(nb_, n_sub_):
        return 2 * weight_bytes + 4 * nb_ * c * (sub_tl * n_sub_) * elt + (4 << 20)

    while estimate(nb, n_sub) > vmem_budget:
        if nb > 1:
            nb = max(1, nb // 2)
        elif n_sub > 1:
            n_sub = max(1, n_sub // 2)
        else:
            break
    tl = sub_tl * n_sub
    return nb, tl, sub_tl, n_sub


def dense_conv1x1_group(x, w_eff, b_eff, *, num_stages, blocks_per_stage):
    """x: (N, C, L). w_eff: (S*B, C, C). b_eff: (S*B, C, 1). Returns (N, C, L)."""
    n, c, l = x.shape
    sb = num_stages * blocks_per_stage
    assert w_eff.shape == (sb, c, c) and b_eff.shape == (sb, c, 1)

    # Keep MXU operands in the activation dtype (bf16 stays bf16, f32 stays
    # f32); accumulation is f32 inside the kernel. Bias stays f32 (added after
    # the f32 accumulation).
    compute_dtype = x.dtype if x.dtype in (jnp.bfloat16, jnp.float32) else jnp.float32
    x_c = x.astype(compute_dtype)
    w_c = w_eff.astype(compute_dtype)
    b_c = b_eff.astype(jnp.float32)

    elt = jnp.dtype(compute_dtype).itemsize
    weight_bytes = (w_c.size * jnp.dtype(w_c.dtype).itemsize
                    + b_c.size * jnp.dtype(b_c.dtype).itemsize)
    vmem_budget = _vmem_budget_bytes()
    nb, tl, sub_tl, n_sub = _plan_tiling(n, c, l, elt, weight_bytes, vmem_budget)

    grid = (_cdiv(n, nb), _cdiv(l, tl))
    kernel = functools.partial(
        _dense_conv1x1_kernel,
        num_stages=num_stages, blocks_per_stage=blocks_per_stage,
        nb=nb, sub_tl=sub_tl, n_sub=n_sub,
    )

    def build(single_buffer_consts):
        if single_buffer_consts:
            # Constant index_map -> one resident copy is enough; halves the
            # weights' VMEM footprint (matters for large S*B*C^2, esp. on v7x).
            w_spec = pl.BlockSpec((sb, c, c), lambda bi, li: (0, 0, 0),
                                  pipeline_mode=pl.Buffered(1))
            b_spec = pl.BlockSpec((sb, c, 1), lambda bi, li: (0, 0, 0),
                                  pipeline_mode=pl.Buffered(1))
        else:
            w_spec = pl.BlockSpec((sb, c, c), lambda bi, li: (0, 0, 0))
            b_spec = pl.BlockSpec((sb, c, 1), lambda bi, li: (0, 0, 0))
        return pl.pallas_call(
            kernel,
            out_shape=jax.ShapeDtypeStruct((n, c, l), x.dtype),
            grid=grid,
            in_specs=[
                w_spec,
                b_spec,
                pl.BlockSpec((nb, c, tl), lambda bi, li: (bi, 0, li)),   # x tile (NCL)
            ],
            out_specs=pl.BlockSpec((nb, c, tl), lambda bi, li: (bi, 0, li)),
            compiler_params=pltpu.CompilerParams(
                dimension_semantics=("parallel", "parallel"),
                vmem_limit_bytes=int(vmem_budget),
            ),
        )

    try:
        out = build(True)(w_c, b_c, x_c)
        return jax.block_until_ready(out)
    except Exception:
        # pl.Buffered(1) on constant-index inputs is a pure optimization; fall
        # back to default double-buffered pipelining if it is rejected.
        out = build(False)(w_c, b_c, x_c)
        return jax.block_until_ready(out)


def make_folded_params(key, channels, num_stages, blocks_per_stage, eps=1e-3):
    """Deterministically build conv + BN params and fold BN (eval mode) into conv."""
    sb = num_stages * blocks_per_stage
    keys = jax.random.split(key, 6)
    # Conv1d(C, C, kernel_size=1): weight (C, C, 1) -> (C, C); bias (C,)
    conv_w = jax.random.normal(keys[0], (sb, channels, channels), jnp.float32) * 0.2
    conv_b = jax.random.normal(keys[1], (sb, channels), jnp.float32) * 0.1
    # BatchNorm1d(C): gamma, beta, running_mean, running_var
    gamma = 1.0 + 0.1 * jax.random.normal(keys[2], (sb, channels), jnp.float32)
    beta = 0.1 * jax.random.normal(keys[3], (sb, channels), jnp.float32)
    r_mean = 0.1 * jax.random.normal(keys[4], (sb, channels), jnp.float32)
    r_var = jnp.abs(1.0 + 0.1 * jax.random.normal(keys[5], (sb, channels), jnp.float32))

    scale = gamma / jnp.sqrt(r_var + eps)                      # (SB, C)
    w_eff = scale[:, :, None] * conv_w                         # (SB, C, C)
    b_eff = scale * (conv_b - r_mean) + beta                   # (SB, C)
    return w_eff, b_eff[:, :, None]                            # bias -> (SB, C, 1)


def reference_forward(x, w_eff, b_eff, *, num_stages, blocks_per_stage):
    """Pure-JAX reference of the same (BN-folded, eval mode) forward pass."""
    cur = x.astype(jnp.float32)
    for s in range(num_stages):
        identity = cur
        for j in range(blocks_per_stage):
            k = s * blocks_per_stage + j
            y = jnp.einsum("oc,ncl->nol", w_eff[k], cur) + b_eff[k][None, :, :]
            cur = jnp.maximum(y, 0.0)
        cur = cur + identity
    return cur


if __name__ == "__main__":
    # Small, module-consistent shapes: Conv1d input is (N, C, L).
    N, C, L = 2, 8, 256
    NUM_STAGES, BLOCKS_PER_STAGE = 2, 3

    key = jax.random.PRNGKey(0)
    k_x, k_p = jax.random.split(key)
    x = jax.random.normal(k_x, (N, C, L), jnp.float32)
    w_eff, b_eff = make_folded_params(k_p, C, NUM_STAGES, BLOCKS_PER_STAGE)

    out = dense_conv1x1_group(
        x, w_eff, b_eff,
        num_stages=NUM_STAGES, blocks_per_stage=BLOCKS_PER_STAGE,
    )
    out = jax.block_until_ready(out)

    ref = reference_forward(
        x, w_eff, b_eff, num_stages=NUM_STAGES, blocks_per_stage=BLOCKS_PER_STAGE
    )
    assert out.shape == (N, C, L)
    assert jnp.allclose(out, ref, atol=1e-4, rtol=1e-4), "mismatch vs JAX reference"

    print("KERNEL_OK")
</pallas_src>

<mosaic_0001>
module attributes {stable_mosaic.version = 11 : i64} {
  func.func @_dense_conv1x1_kernel(%arg0: i32, %arg1: i32, %arg2: memref<6x8x8xf32, #tpu.memory_space<vmem>>, %arg3: memref<6x8x1xf32, #tpu.memory_space<vmem>>, %arg4: memref<1x8x256xf32, #tpu.memory_space<vmem>>, %arg5: memref<1x8x256xf32, #tpu.memory_space<vmem>>) attributes {dimension_semantics = [#tpu.dimension_semantics<parallel>, #tpu.dimension_semantics<parallel>], iteration_bounds = array<i64: 2, 1>, scalar_prefetch = 0 : i64, scratch_operands = 0 : i64, tpu.core_type = #tpu.core_type<tc>, window_params = [{pipeline_mode = #tpu.pipeline_mode<synchronous>, transform_indices = @transform_0, window_bounds = array<i64: 6, 8, 8>}, {pipeline_mode = #tpu.pipeline_mode<synchronous>, transform_indices = @transform_1, window_bounds = array<i64: 6, 8, 1>}, {transform_indices = @transform_2, window_bounds = array<i64: 1, 8, 256>}, {transform_indices = @transform_3, window_bounds = array<i64: 1, 8, 256>}]} {
    %c0 = arith.constant 0 : index
    %c0_0 = arith.constant 0 : index
    %c0_1 = arith.constant 0 : index
    %0 = vector.load %arg4[%c0, %c0_0, %c0_1] : memref<1x8x256xf32, #tpu.memory_space<vmem>>, vector<1x8x256xf32>
    %1 = vector.shape_cast %0 : vector<1x8x256xf32> to vector<8x256xf32>
    %c0_2 = arith.constant 0 : index
    %c0_3 = arith.constant 0 : index
    %c0_4 = arith.constant 0 : index
    %2 = vector.load %arg2[%c0_2, %c0_3, %c0_4] : memref<6x8x8xf32, #tpu.memory_space<vmem>>, vector<1x8x8xf32>
    %3 = vector.shape_cast %2 : vector<1x8x8xf32> to vector<8x8xf32>
    %c0_5 = arith.constant 0 : index
    %c0_6 = arith.constant 0 : index
    %c0_7 = arith.constant 0 : index
    %4 = vector.load %arg3[%c0_5, %c0_6, %c0_7] : memref<6x8x1xf32, #tpu.memory_space<vmem>>, vector<1x8x1xf32>
    %5 = vector.shape_cast %4 : vector<1x8x1xf32> to vector<8x1xf32>
    %cst = arith.constant dense<0.000000e+00> : vector<8x256xf32>
    %6 = tpu.matmul %3, %1, %cst {dimension_numbers = #tpu.dot_dimension_numbers<[1], [0], [0], [1], [0, 0, 1, 1], [], []>} : vector<8x8xf32>, vector<8x256xf32>, vector<8x256xf32> -> vector<8x256xf32>
    %7 = vector.broadcast %5 : vector<8x1xf32> to vector<8x256xf32>
    %8 = arith.addf %6, %7 : vector<8x256xf32>
    %cst_8 = arith.constant 0.000000e+00 : f32
    %9 = vector.broadcast %cst_8 : f32 to vector<8x256xf32>
    %10 = arith.maximumf %8, %9 : vector<8x256xf32>
    %c1 = arith.constant 1 : index
    %c0_9 = arith.constant 0 : index
    %c0_10 = arith.constant 0 : index
    %11 = vector.load %arg2[%c1, %c0_9, %c0_10] : memref<6x8x8xf32, #tpu.memory_space<vmem>>, vector<1x8x8xf32>
    %12 = vector.shape_cast %11 : vector<1x8x8xf32> to vector<8x8xf32>
    %c1_11 = arith.constant 1 : index
    %c0_12 = arith.constant 0 : index
    %c0_13 = arith.constant 0 : index
    %13 = vector.load %arg3[%c1_11, %c0_12, %c0_13] : memref<6x8x1xf32, #tpu.memory_space<vmem>>, vector<1x8x1xf32>
    %14 = vector.shape_cast %13 : vector<1x8x1xf32> to vector<8x1xf32>
    %cst_14 = arith.constant dense<0.000000e+00> : vector<8x256xf32>
    %15 = tpu.matmul %12, %10, %cst_14 {dimension_numbers = #tpu.dot_dimension_numbers<[1], [0], [0], [1], [0, 0, 1, 1], [], []>} : vector<8x8xf32>, vector<8x256xf32>, vector<8x256xf32> -> vector<8x256xf32>
    %16 = vector.broadcast %14 : vector<8x1xf32> to vector<8x256xf32>
    %17 = arith.addf %15, %16 : vector<8x256xf32>
    %cst_15 = arith.constant 0.000000e+00 : f32
    %18 = vector.broadcast %cst_15 : f32 to vector<8x256xf32>
    %19 = arith.maximumf %17, %18 : vector<8x256xf32>
    %c2 = arith.constant 2 : index
    %c0_16 = arith.constant 0 : index
    %c0_17 = arith.constant 0 : index
    %20 = vector.load %arg2[%c2, %c0_16, %c0_17] : memref<6x8x8xf32, #tpu.memory_space<vmem>>, vector<1x8x8xf32>
    %21 = vector.shape_cast %20 : vector<1x8x8xf32> to vector<8x8xf32>
    %c2_18 = arith.constant 2 : index
    %c0_19 = arith.constant 0 : index
    %c0_20 = arith.constant 0 : index
    %22 = vector.load %arg3[%c2_18, %c0_19, %c0_20] : memref<6x8x1xf32, #tpu.memory_space<vmem>>, vector<1x8x1xf32>
    %23 = vector.shape_cast %22 : vector<1x8x1xf32> to vector<8x1xf32>
    %cst_21 = arith.constant dense<0.000000e+00> : vector<8x256xf32>
    %24 = tpu.matmul %21, %19, %cst_21 {dimension_numbers = #tpu.dot_dimension_numbers<[1], [0], [0], [1], [0, 0, 1, 1], [], []>} : vector<8x8xf32>, vector<8x256xf32>, vector<8x256xf32> -> vector<8x256xf32>
    %25 = vector.broadcast %23 : vector<8x1xf32> to vector<8x256xf32>
    %26 = arith.addf %24, %25 : vector<8x256xf32>
    %cst_22 = arith.constant 0.000000e+00 : f32
    %27 = vector.broadcast %cst_22 : f32 to vector<8x256xf32>
    %28 = arith.maximumf %26, %27 : vector<8x256xf32>
    %29 = arith.addf %28, %1 : vector<8x256xf32>
    %c3 = arith.constant 3 : index
    %c0_23 = arith.constant 0 : index
    %c0_24 = arith.constant 0 : index
    %30 = vector.load %arg2[%c3, %c0_23, %c0_24] : memref<6x8x8xf32, #tpu.memory_space<vmem>>, vector<1x8x8xf32>
    %31 = vector.shape_cast %30 : vector<1x8x8xf32> to vector<8x8xf32>
    %c3_25 = arith.constant 3 : index
    %c0_26 = arith.constant 0 : index
    %c0_27 = arith.constant 0 : index
    %32 = vector.load %arg3[%c3_25, %c0_26, %c0_27] : memref<6x8x1xf32, #tpu.memory_space<vmem>>, vector<1x8x1xf32>
    %33 = vector.shape_cast %32 : vector<1x8x1xf32> to vector<8x1xf32>
    %cst_28 = arith.constant dense<0.000000e+00> : vector<8x256xf32>
    %34 = tpu.matmul %31, %29, %cst_28 {dimension_numbers = #tpu.dot_dimension_numbers<[1], [0], [0], [1], [0, 0, 1, 1], [], []>} : vector<8x8xf32>, vector<8x256xf32>, vector<8x256xf32> -> vector<8x256xf32>
    %35 = vector.broadcast %33 : vector<8x1xf32> to vector<8x256xf32>
    %36 = arith.addf %34, %35 : vector<8x256xf32>
    %cst_29 = arith.constant 0.000000e+00 : f32
    %37 = vector.broadcast %cst_29 : f32 to vector<8x256xf32>
    %38 = arith.maximumf %36, %37 : vector<8x256xf32>
    %c4 = arith.constant 4 : index
    %c0_30 = arith.constant 0 : index
    %c0_31 = arith.constant 0 : index
    %39 = vector.load %arg2[%c4, %c0_30, %c0_31] : memref<6x8x8xf32, #tpu.memory_space<vmem>>, vector<1x8x8xf32>
    %40 = vector.shape_cast %39 : vector<1x8x8xf32> to vector<8x8xf32>
    %c4_32 = arith.constant 4 : index
    %c0_33 = arith.constant 0 : index
    %c0_34 = arith.constant 0 : index
    %41 = vector.load %arg3[%c4_32, %c0_33, %c0_34] : memref<6x8x1xf32, #tpu.memory_space<vmem>>, vector<1x8x1xf32>
    %42 = vector.shape_cast %41 : vector<1x8x1xf32> to vector<8x1xf32>
    %cst_35 = arith.constant dense<0.000000e+00> : vector<8x256xf32>
    %43 = tpu.matmul %40, %38, %cst_35 {dimension_numbers = #tpu.dot_dimension_numbers<[1], [0], [0], [1], [0, 0, 1, 1], [], []>} : vector<8x8xf32>, vector<8x256xf32>, vector<8x256xf32> -> vector<8x256xf32>
    %44 = vector.broadcast %42 : vector<8x1xf32> to vector<8x256xf32>
    %45 = arith.addf %43, %44 : vector<8x256xf32>
    %cst_36 = arith.constant 0.000000e+00 : f32
    %46 = vector.broadcast %cst_36 : f32 to vector<8x256xf32>
    %47 = arith.maximumf %45, %46 : vector<8x256xf32>
    %c5 = arith.constant 5 : index
    %c0_37 = arith.constant 0 : index
    %c0_38 = arith.constant 0 : index
    %48 = vector.load %arg2[%c5, %c0_37, %c0_38] : memref<6x8x8xf32, #tpu.memory_space<vmem>>, vector<1x8x8xf32>
    %49 = vector.shape_cast %48 : vector<1x8x8xf32> to vector<8x8xf32>
    %c5_39 = arith.constant 5 : index
    %c0_40 = arith.constant 0 : index
    %c0_41 = arith.constant 0 : index
    %50 = vector.load %arg3[%c5_39, %c0_40, %c0_41] : memref<6x8x1xf32, #tpu.memory_space<vmem>>, vector<1x8x1xf32>
    %51 = vector.shape_cast %50 : vector<1x8x1xf32> to vector<8x1xf32>
    %cst_42 = arith.constant dense<0.000000e+00> : vector<8x256xf32>
    %52 = tpu.matmul %49, %47, %cst_42 {dimension_numbers = #tpu.dot_dimension_numbers<[1], [0], [0], [1], [0, 0, 1, 1], [], []>} : vector<8x8xf32>, vector<8x256xf32>, vector<8x256xf32> -> vector<8x256xf32>
    %53 = vector.broadcast %51 : vector<8x1xf32> to vector<8x256xf32>
    %54 = arith.addf %52, %53 : vector<8x256xf32>
    %cst_43 = arith.constant 0.000000e+00 : f32
    %55 = vector.broadcast %cst_43 : f32 to vector<8x256xf32>
    %56 = arith.maximumf %54, %55 : vector<8x256xf32>
    %57 = arith.addf %56, %29 : vector<8x256xf32>
    %c0_44 = arith.constant 0 : index
    %c0_45 = arith.constant 0 : index
    %c0_46 = arith.constant 0 : index
    %58 = vector.load %arg5[%c0_44, %c0_45, %c0_46] : memref<1x8x256xf32, #tpu.memory_space<vmem>>, vector<1x8x256xf32>
    %59 = vector.shape_cast %58 : vector<1x8x256xf32> to vector<8x256xf32>
    %60 = vector.shape_cast %57 : vector<8x256xf32> to vector<1x8x256xf32>
    tpu.vector_store %arg5[%c0_44, %c0_45, %c0_46], %60 {strides = array<i32>} : memref<1x8x256xf32, #tpu.memory_space<vmem>>, vector<1x8x256xf32>,
    return
  }
  func.func @transform_0(%arg0: i32, %arg1: i32) -> (i32, i32, i32) {
    %c0_i32 = arith.constant 0 : i32
    %c0_i32_0 = arith.constant 0 : i32
    %c0_i32_1 = arith.constant 0 : i32
    %c0_i32_2 = arith.constant 0 : i32
    return %c0_i32, %c0_i32_0, %c0_i32_1 : i32, i32, i32
  }
  func.func @transform_1(%arg0: i32, %arg1: i32) -> (i32, i32, i32) {
    %c0_i32 = arith.constant 0 : i32
    %c0_i32_0 = arith.constant 0 : i32
    %c0_i32_1 = arith.constant 0 : i32
    %c0_i32_2 = arith.constant 0 : i32
    return %c0_i32, %c0_i32_0, %c0_i32_1 : i32, i32, i32
  }
  func.func @transform_2(%arg0: i32, %arg1: i32) -> (i32, i32, i32) {
    %c0_i32 = arith.constant 0 : i32
    %c0_i32_0 = arith.constant 0 : i32
    return %arg0, %c0_i32, %arg1 : i32, i32, i32
  }
  func.func @transform_3(%arg0: i32, %arg1: i32) -> (i32, i32, i32) {
    %c0_i32 = arith.constant 0 : i32
    %c0_i32_0 = arith.constant 0 : i32
    return %arg0, %c0_i32, %arg1 : i32, i32, i32
  }
}

module attributes {stable_mosaic.version = 11 : i64} {
  func.func @_dense_conv1x1_kernel(%arg0: i32, %arg1: i32, %arg2: memref<6x8x8xf32, #tpu.memory_space<vmem>>, %arg3: memref<6x8x1xf32, #tpu.memory_space<vmem>>, %arg4: memref<1x8x256xf32, #tpu.memory_space<vmem>>, %arg5: memref<1x8x256xf32, #tpu.memory_space<vmem>>) attributes {dimension_semantics = [#tpu.dimension_semantics<parallel>, #tpu.dimension_semantics<parallel>], iteration_bounds = array<i64: 2, 1>, scalar_prefetch = 0 : i64, scratch_operands = 0 : i64, tpu.core_type = #tpu.core_type<tc>, window_params = [{pipeline_mode = #tpu.pipeline_mode<synchronous>, transform_indices = @transform_0, window_bounds = array<i64: 6, 8, 8>}, {pipeline_mode = #tpu.pipeline_mode<synchronous>, transform_indices = @transform_1, window_bounds = array<i64: 6, 8, 1>}, {transform_indices = @transform_2, window_bounds = array<i64: 1, 8, 256>}, {transform_indices = @transform_3, window_bounds = array<i64: 1, 8, 256>}]} {
    %c0 = arith.constant 0 : index
    %c0_0 = arith.constant 0 : index
    %c0_1 = arith.constant 0 : index
    %0 = vector.load %arg4[%c0, %c0_0, %c0_1] : memref<1x8x256xf32, #tpu.memory_space<vmem>>, vector<1x8x256xf32>
    %1 = vector.shape_cast %0 : vector<1x8x256xf32> to vector<8x256xf32>
    %c0_2 = arith.constant 0 : index
    %c0_3 = arith.constant 0 : index
    %c0_4 = arith.constant 0 : index
    %2 = vector.load %arg2[%c0_2, %c0_3, %c0_4] : memref<6x8x8xf32, #tpu.memory_space<vmem>>, vector<1x8x8xf32>
    %3 = vector.shape_cast %2 : vector<1x8x8xf32> to vector<8x8xf32>
    %c0_5 = arith.constant 0 : index
    %c0_6 = arith.constant 0 : index
    %c0_7 = arith.constant 0 : index
    %4 = vector.load %arg3[%c0_5, %c0_6, %c0_7] : memref<6x8x1xf32, #tpu.memory_space<vmem>>, vector<1x8x1xf32>
    %5 = vector.shape_cast %4 : vector<1x8x1xf32> to vector<8x1xf32>
    %cst = arith.constant dense<0.000000e+00> : vector<8x256xf32>
    %6 = tpu.matmul %3, %1, %cst {dimension_numbers = #tpu.dot_dimension_numbers<[1], [0], [0], [1], [0, 0, 1, 1], [], []>} : vector<8x8xf32>, vector<8x256xf32>, vector<8x256xf32> -> vector<8x256xf32>
    %7 = vector.broadcast %5 : vector<8x1xf32> to vector<8x256xf32>
    %8 = arith.addf %6, %7 : vector<8x256xf32>
    %cst_8 = arith.constant 0.000000e+00 : f32
    %9 = vector.broadcast %cst_8 : f32 to vector<8x256xf32>
    %10 = arith.maximumf %8, %9 : vector<8x256xf32>
    %c1 = arith.constant 1 : index
    %c0_9 = arith.constant 0 : index
    %c0_10 = arith.constant 0 : index
    %11 = vector.load %arg2[%c1, %c0_9, %c0_10] : memref<6x8x8xf32, #tpu.memory_space<vmem>>, vector<1x8x8xf32>
    %12 = vector.shape_cast %11 : vector<1x8x8xf32> to vector<8x8xf32>
    %c1_11 = arith.constant 1 : index
    %c0_12 = arith.constant 0 : index
    %c0_13 = arith.constant 0 : index
    %13 = vector.load %arg3[%c1_11, %c0_12, %c0_13] : memref<6x8x1xf32, #tpu.memory_space<vmem>>, vector<1x8x1xf32>
    %14 = vector.shape_cast %13 : vector<1x8x1xf32> to vector<8x1xf32>
    %cst_14 = arith.constant dense<0.000000e+00> : vector<8x256xf32>
    %15 = tpu.matmul %12, %10, %cst_14 {dimension_numbers = #tpu.dot_dimension_numbers<[1], [0], [0], [1], [0, 0, 1, 1], [], []>} : vector<8x8xf32>, vector<8x256xf32>, vector<8x256xf32> -> vector<8x256xf32>
    %16 = vector.broadcast %14 : vector<8x1xf32> to vector<8x256xf32>
    %17 = arith.addf %15, %16 : vector<8x256xf32>
    %cst_15 = arith.constant 0.000000e+00 : f32
    %18 = vector.broadcast %cst_15 : f32 to vector<8x256xf32>
    %19 = arith.maximumf %17, %18 : vector<8x256xf32>
    %c2 = arith.constant 2 : index
    %c0_16 = arith.constant 0 : index
    %c0_17 = arith.constant 0 : index
    %20 = vector.load %arg2[%c2, %c0_16, %c0_17] : memref<6x8x8xf32, #tpu.memory_space<vmem>>, vector<1x8x8xf32>
    %21 = vector.shape_cast %20 : vector<1x8x8xf32> to vector<8x8xf32>
    %c2_18 = arith.constant 2 : index
    %c0_19 = arith.constant 0 : index
    %c0_20 = arith.constant 0 : index
    %22 = vector.load %arg3[%c2_18, %c0_19, %c0_20] : memref<6x8x1xf32, #tpu.memory_space<vmem>>, vector<1x8x1xf32>
    %23 = vector.shape_cast %22 : vector<1x8x1xf32> to vector<8x1xf32>
    %cst_21 = arith.constant dense<0.000000e+00> : vector<8x256xf32>
    %24 = tpu.matmul %21, %19, %cst_21 {dimension_numbers = #tpu.dot_dimension_numbers<[1], [0], [0], [1], [0, 0, 1, 1], [], []>} : vector<8x8xf32>, vector<8x256xf32>, vector<8x256xf32> -> vector<8x256xf32>
    %25 = vector.broadcast %23 : vector<8x1xf32> to vector<8x256xf32>
    %26 = arith.addf %24, %25 : vector<8x256xf32>
    %cst_22 = arith.constant 0.000000e+00 : f32
    %27 = vector.broadcast %cst_22 : f32 to vector<8x256xf32>
    %28 = arith.maximumf %26, %27 : vector<8x256xf32>
    %29 = arith.addf %28, %1 : vector<8x256xf32>
    %c3 = arith.constant 3 : index
    %c0_23 = arith.constant 0 : index
    %c0_24 = arith.constant 0 : index
    %30 = vector.load %arg2[%c3, %c0_23, %c0_24] : memref<6x8x8xf32, #tpu.memory_space<vmem>>, vector<1x8x8xf32>
    %31 = vector.shape_cast %30 : vector<1x8x8xf32> to vector<8x8xf32>
    %c3_25 = arith.constant 3 : index
    %c0_26 = arith.constant 0 : index
    %c0_27 = arith.constant 0 : index
    %32 = vector.load %arg3[%c3_25, %c0_26, %c0_27] : memref<6x8x1xf32, #tpu.memory_space<vmem>>, vector<1x8x1xf32>
    %33 = vector.shape_cast %32 : vector<1x8x1xf32> to vector<8x1xf32>
    %cst_28 = arith.constant dense<0.000000e+00> : vector<8x256xf32>
    %34 = tpu.matmul %31, %29, %cst_28 {dimension_numbers = #tpu.dot_dimension_numbers<[1], [0], [0], [1], [0, 0, 1, 1], [], []>} : vector<8x8xf32>, vector<8x256xf32>, vector<8x256xf32> -> vector<8x256xf32>
    %35 = vector.broadcast %33 : vector<8x1xf32> to vector<8x256xf32>
    %36 = arith.addf %34, %35 : vector<8x256xf32>
    %cst_29 = arith.constant 0.000000e+00 : f32
    %37 = vector.broadcast %cst_29 : f32 to vector<8x256xf32>
    %38 = arith.maximumf %36, %37 : vector<8x256xf32>
    %c4 = arith.constant 4 : index
    %c0_30 = arith.constant 0 : index
    %c0_31 = arith.constant 0 : index
    %39 = vector.load %arg2[%c4, %c0_30, %c0_31] : memref<6x8x8xf32, #tpu.memory_space<vmem>>, vector<1x8x8xf32>
    %40 = vector.shape_cast %39 : vector<1x8x8xf32> to vector<8x8xf32>
    %c4_32 = arith.constant 4 : index
    %c0_33 = arith.constant 0 : index
    %c0_34 = arith.constant 0 : index
    %41 = vector.load %arg3[%c4_32, %c0_33, %c0_34] : memref<6x8x1xf32, #tpu.memory_space<vmem>>, vector<1x8x1xf32>
    %42 = vector.shape_cast %41 : vector<1x8x1xf32> to vector<8x1xf32>
    %cst_35 = arith.constant dense<0.000000e+00> : vector<8x256xf32>
    %43 = tpu.matmul %40, %38, %cst_35 {dimension_numbers = #tpu.dot_dimension_numbers<[1], [0], [0], [1], [0, 0, 1, 1], [], []>} : vector<8x8xf32>, vector<8x256xf32>, vector<8x256xf32> -> vector<8x256xf32>
    %44 = vector.broadcast %42 : vector<8x1xf32> to vector<8x256xf32>
    %45 = arith.addf %43, %44 : vector<8x256xf32>
    %cst_36 = arith.constant 0.000000e+00 : f32
    %46 = vector.broadcast %cst_36 : f32 to vector<8x256xf32>
    %47 = arith.maximumf %45, %46 : vector<8x256xf32>
    %c5 = arith.constant 5 : index
    %c0_37 = arith.constant 0 : index
    %c0_38 = arith.constant 0 : index
    %48 = vector.load %arg2[%c5, %c0_37, %c0_38] : memref<6x8x8xf32, #tpu.memory_space<vmem>>, vector<1x8x8xf32>
    %49 = vector.shape_cast %48 : vector<1x8x8xf32> to vector<8x8xf32>
    %c5_39 = arith.constant 5 : index
    %c0_40 = arith.constant 0 : index
    %c0_41 = arith.constant 0 : index
    %50 = vector.load %arg3[%c5_39, %c0_40, %c0_41] : memref<6x8x1xf32, #tpu.memory_space<vmem>>, vector<1x8x1xf32>
    %51 = vector.shape_cast %50 : vector<1x8x1xf32> to vector<8x1xf32>
    %cst_42 = arith.constant dense<0.000000e+00> : vector<8x256xf32>
    %52 = tpu.matmul %49, %47, %cst_42 {dimension_numbers = #tpu.dot_dimension_numbers<[1], [0], [0], [1], [0, 0, 1, 1], [], []>} : vector<8x8xf32>, vector<8x256xf32>, vector<8x256xf32> -> vector<8x256xf32>
    %53 = vector.broadcast %51 : vector<8x1xf32> to vector<8x256xf32>
    %54 = arith.addf %52, %53 : vector<8x256xf32>
    %cst_43 = arith.constant 0.000000e+00 : f32
    %55 = vector.broadcast %cst_43 : f32 to vector<8x256xf32>
    %56 = arith.maximumf %54, %55 : vector<8x256xf32>
    %57 = arith.addf %56, %29 : vector<8x256xf32>
    %c0_44 = arith.constant 0 : index
    %c0_45 = arith.constant 0 : index
    %c0_46 = arith.constant 0 : index
    %58 = vector.load %arg5[%c0_44, %c0_45, %c0_46] : memref<1x8x256xf32, #tpu.memory_space<vmem>>, vector<1x8x256xf32>
    %59 = vector.shape_cast %58 : vector<1x8x256xf32> to vector<8x256xf32>
    %60 = vector.shape_cast %57 : vector<8x256xf32> to vector<1x8x256xf32>
    tpu.vector_store %arg5[%c0_44, %c0_45, %c0_46], %60 {strides = array<i32>} : memref<1x8x256xf32, #tpu.memory_space<vmem>>, vector<1x8x256xf32>,
    return
  }
  func.func @transform_0(%arg0: i32, %arg1: i32) -> (i32, i32, i32) {
    %c0_i32 = arith.constant 0 : i32
    %c0_i32_0 = arith.constant 0 : i32
    %c0_i32_1 = arith.constant 0 : i32
    %c0_i32_2 = arith.constant 0 : i32
    return %c0_i32, %c0_i32_0, %c0_i32_1 : i32, i32, i32
  }
  func.func @transform_1(%arg0: i32, %arg1: i32) -> (i32, i32, i32) {
    %c0_i32 = arith.constant 0 : i32
    %c0_i32_0 = arith.constant 0 : i32
    %c0_i32_1 = arith.constant 0 : i32
    %c0_i32_2 = arith.constant 0 : i32
    return %c0_i32, %c0_i32_0, %c0_i32_1 : i32, i32, i32
  }
  func.func @transform_2(%arg0: i32, %arg1: i32) -> (i32, i32, i32) {
    %c0_i32 = arith.constant 0 : i32
    %c0_i32_0 = arith.constant 0 : i32
    return %arg0, %c0_i32, %arg1 : i32, i32, i32
  }
  func.func @transform_3(%arg0: i32, %arg1: i32) -> (i32, i32, i32) {
    %c0_i32 = arith.constant 0 : i32
    %c0_i32_0 = arith.constant 0 : i32
    return %arg0, %c0_i32, %arg1 : i32, i32, i32
  }
}

</mosaic_0001>

<llo_original>
// kernel: tpu_custom_call.1
$region0: #{tpu_custom_call.1}
  #allocation0 [shape = 'u32[]', space=smem, size = 0x4, offset = 0x4, fixed_abs, tag = 'smem constant byte address 0x4 - core index']
  #allocation1 [shape = 'u32[144,128]{1,0:T(1,128)}', space=vmem, size = 0x12000, scoped, tag = 'internal scratch']
  %s0 = inlined_call_operand.vmem [shape: f32[6,8,8], index: 0, kind: input, shape index: {}]
  %s1 = inlined_call_operand.vmem [shape: f32[6,8,1], index: 1, kind: input, shape index: {}]
  %s2 = inlined_call_operand.hbm [shape: f32[2,8,256], index: 2, kind: input, shape index: {}]
  %s3 = inlined_call_operand.hbm [shape: f32[2,8,256], index: 3, kind: output, shape index: {}]
  %s4 = sld [smem:[#allocation0]]
  $region49: #{tpu_custom_call.1} parent=0
    _
  %s6 = ssub.s32 1, %s4
  %s7 = scalar_select 0, %s6, %s4
  $region1: #{tpu_custom_call.1} parent=0
    #allocation2 [shape = 'u8[16384]{0}', space=vmem, size = 0x4000, scoped, tag = 'input window, operand 2']
    #allocation3 [shape = 's32[2]{0}', space=sflag, size = 0x8, scoped, tag = 'scoped memory for tpu_custom_call.1']
    #allocation4 [shape = 's32[2]{0}', space=sflag, size = 0x8, scoped, tag = 'scoped memory for tpu_custom_call.1']
    #allocation5 [shape = 'u8[16384]{0}', space=vmem, size = 0x4000, scoped, tag = 'output window, operand 0']
    %8 = vsyncpa [#allocation3], 0
    %s9 = scalar_lea.sflag [#allocation3], 1
    %10 = vsyncpa %s9, 0
    %11 = vsyncpa [#allocation4], 0
    %s12 = scalar_lea.sflag [#allocation4], 1
    %13 = vsyncpa %s12, 0
    loop: start=0, step=1, limit=4
    $region2: #{tpu_custom_call.1} parent=1 // loop_pre_header
      _
    $region3: #{tpu_custom_call.1} parent=1 // loop_header
      %s15 = sphi 0, %s19
      %p16 = scmp.ge.s32.totalorder %s15, 4
      %s22 = sphi 0, %s34
      %s23 = sphi 0, %s30
      %s24 = sphi 0, %s22
      %s25 = sphi 0, %s23
      %s26 = sphi 0, %s24
      %s27 = sphi 0, %s25
      %s35 = sphi 0, %s35
      %s37 = sphi 0, %s35
      %s38 = sphi 0, %s37
      %s52 = sphi 0, %s38
      %s56 = sphi 0, %s56
      %s58 = sphi 0, %s56
      %s59 = sphi 0, %s58
      %s73 = sphi 0, %s59
      %s81 = sphi 0, %s83
      %s84 = sphi 0, %s81
      %s85 = sphi 0, %s84
      %s101 = sphi 0, %s85
      %s109 = sphi 0, %s111
      %s112 = sphi 0, %s109
      %s113 = sphi 0, %s112
      %s129 = sphi 0, %s113
    $region4: #{tpu_custom_call.1} parent=1 // loop_header_branch
      %18 = sbr.rel (%p16) target = $region8
    $region5: #{tpu_custom_call.1} parent=1 // loop_body
      %s20 = ssub.s32 %s15, 1
      %s21 = ssub.s32 %s15, 2
      %s28 = sadd.s32 1, %s23
      %p29 = scmp.ge.s32.totalorder %s28, 1
      %s30 = scalar_select %p29, 0, %s28
      %s31 = sadd.s32 1, %s22
      %s32 = scalar_select %p29, %s31, %s22
      %p33 = scmp.ge.s32.totalorder %s32, 2
      %s34 = scalar_select %p33, 0, %s32
      %s36 = sadd.s32 %s35, 1
      %p39 = scmp.eq.s32.totalorder %s15, 1
      %p40 = scmp.ne.s32.totalorder %s35, %s37
      %p41 = scmp.eq.s32.totalorder %s15, 0
      %p42 = por %p40, %p41
      %p43 = scmp.ne.s32.totalorder %s35, %s37
      %p44 = scmp.eq.s32.totalorder %s20, 1
      %p45 = por %p43, %p44
      %p46 = scmp.ne.s32.totalorder %s37, %s38
      %p47 = scmp.eq.s32.totalorder %s20, 0
      %p48 = por %p46, %p47
      %p49 = scmp.ne.s32.totalorder %s37, %s38
      %p50 = scmp.eq.s32.totalorder %s21, 1
      %p51 = por %p49, %p50
      %p53 = scmp.ne.s32.totalorder %s38, %s52
      %p54 = scmp.eq.s32.totalorder %s21, 0
      %p55 = por %p53, %p54
      %s57 = sadd.s32 %s56, 1
      %p60 = scmp.eq.s32.totalorder %s15, 1
      %p61 = scmp.ne.s32.totalorder %s56, %s58
      %p62 = scmp.eq.s32.totalorder %s15, 0
      %p63 = por %p61, %p62
      %p64 = scmp.ne.s32.totalorder %s56, %s58
      %p65 = scmp.eq.s32.totalorder %s20, 1
      %p66 = por %p64, %p65
      %p67 = scmp.ne.s32.totalorder %s58, %s59
      %p68 = scmp.eq.s32.totalorder %s20, 0
      %p69 = por %p67, %p68
      %p70 = scmp.ne.s32.totalorder %s58, %s59
      %p71 = scmp.eq.s32.totalorder %s21, 1
      %p72 = por %p70, %p71
      %p74 = scmp.ne.s32.totalorder %s59, %s73
      %p75 = scmp.eq.s32.totalorder %s21, 0
      %p76 = por %p74, %p75
      %s77 = ssub.s32 %s22, %s34
      %s78 = ssub.s32 %s23, %s30
      %s79 = sor.u32 %s77, %s78
      %p80 = scmp.eq.s32.totalorder %s79, 0
      %s82 = sadd.s32 %s81, 1
      %s83 = scalar_select %p80, %s81, %s82
      %p86 = pneg %p80
      %p87 = scmp.eq.s32.totalorder %s15, 1
      %p88 = por %p86, %p87
      %p89 = scmp.ne.s32.totalorder %s81, %s84
      %p90 = scmp.eq.s32.totalorder %s15, 0
      %p91 = por %p89, %p90
      %p92 = scmp.ne.s32.totalorder %s81, %s84
      %p93 = scmp.eq.s32.totalorder %s20, 1
      %p94 = por %p92, %p93
      %p95 = scmp.ne.s32.totalorder %s84, %s85
      %p96 = scmp.eq.s32.totalorder %s20, 0
      %p97 = por %p95, %p96
      %p98 = scmp.ne.s32.totalorder %s84, %s85
      %p99 = scmp.eq.s32.totalorder %s21, 1
      %p100 = por %p98, %p99
      %p102 = scmp.ne.s32.totalorder %s85, %s101
      %p103 = scmp.eq.s32.totalorder %s21, 0
      %p104 = por %p102, %p103
      %s105 = ssub.s32 %s22, %s34
      %s106 = ssub.s32 %s23, %s30
      %s107 = sor.u32 %s105, %s106
      %p108 = scmp.eq.s32.totalorder %s107, 0
      %s110 = sadd.s32 %s109, 1
      %s111 = scalar_select %p108, %s109, %s110
      %p114 = pneg %p108
      %p115 = scmp.eq.s32.totalorder %s15, 1
      %p116 = por %p114, %p115
      %p117 = scmp.ne.s32.totalorder %s109, %s112
      %p118 = scmp.eq.s32.totalorder %s15, 0
      %p119 = por %p117, %p118
      %p120 = scmp.ne.s32.totalorder %s109, %s112
      %p121 = scmp.eq.s32.totalorder %s20, 1
      %p122 = por %p120, %p121
      %p123 = scmp.ne.s32.totalorder %s112, %s113
      %p124 = scmp.eq.s32.totalorder %s20, 0
      %p125 = por %p123, %p124
      %p126 = scmp.ne.s32.totalorder %s112, %s113
      %p127 = scmp.eq.s32.totalorder %s21, 1
      %p128 = por %p126, %p127
      %p130 = scmp.ne.s32.totalorder %s113, %s129
      %p131 = scmp.eq.s32.totalorder %s21, 0
      %p132 = por %p130, %p131
      %p133 = scmp.le.s32.totalorder 1, %s15
      %p134 = scmp.lt.s32.totalorder %s15, 3
      %p135 = pnand %p133, %p134
      %p136 = pneg %p135
      // Predicated region
      $region9: #{tpu_custom_call.1} parent=5 // pred_check
        _
      $region10: #{tpu_custom_call.1} parent=5 // pred_check_branch
        %138 = sbr.rel (%p135) target = $region12
      $region11: #{tpu_custom_call.1} parent=5 // pred_region
        %s139 = ssub.s32 %s15, 1
        // Predicated region
        $region13: #{tpu_custom_call.1} parent=11 // pred_check
          %p140 = pneg %p48
        $region14: #{tpu_custom_call.1} parent=11 // pred_check_branch
          %142 = sbr.rel (%p140) target = $region16
        $region15: #{tpu_custom_call.1} parent=11 // pred_region
          _
        $region16: #{tpu_custom_call.1} parent=11 // pred_fallthru
          _
        // Predicated region
        $region17: #{tpu_custom_call.1} parent=11 // pred_check
          %p143 = pneg %p69
        $region18: #{tpu_custom_call.1} parent=11 // pred_check_branch
          %145 = sbr.rel (%p143) target = $region20
        $region19: #{tpu_custom_call.1} parent=11 // pred_region
          _
        $region20: #{tpu_custom_call.1} parent=11 // pred_fallthru
          _
      $region12: #{tpu_custom_call.1} parent=5 // pred_fallthru
        _
      %p146 = scmp.lt.s32.totalorder %s15, 2
      // Predicated region
      $region21: #{tpu_custom_call.1} parent=5 // pred_check
        %p147 = pneg %p146
      $region22: #{tpu_custom_call.1} parent=5 // pred_check_branch
        %149 = sbr.rel (%p147) target = $region24
      $region23: #{tpu_custom_call.1} parent=5 // pred_region
        // Predicated region
        $region25: #{tpu_custom_call.1} parent=23 // pred_check
          %p150 = pneg %p91
        $region26: #{tpu_custom_call.1} parent=23 // pred_check_branch
          %152 = sbr.rel (%p150) target = $region28
        $region27: #{tpu_custom_call.1} parent=23 // pred_region
          %s153 = sand.u32 %s81, 1
          %s154 = scalar_lea.sflag [#allocation3], %s153
          %s155 = sand.u32 %s81, 1
          %s156 = smul.addr %s155, 16
          %s157 = scalar_lea.vmem [#allocation2], %s156
          %s158 = smul.u32 2, %s23
          %s160 = ssub.s32 256, 256
          %161 = vsyncadd %s154, %s160
          %s162 = smul.addr %s22, 2
          %s163 = sadd.s32 %s158, %s162
          %s164 = smul.addr %s163, 128
          %s165 = scalar_lea.hbm %s2, %s164
          %s167 = sshll.u32 %s157, 4
          %s168 = int_to_ptr.vmem [resolvable:$true] %s167
          %170 = dma.hbm_to_vmem [thread:$0]  %s165, 256, %s168, %s154
        $region28: #{tpu_custom_call.1} parent=23 // pred_fallthru
          _
      $region24: #{tpu_custom_call.1} parent=5 // pred_fallthru
        _
      %p171 = scmp.le.s32.totalorder 1, %s15
      %p172 = scmp.lt.s32.totalorder %s15, 3
      %p173 = pnand %p171, %p172
      %p174 = pneg %p173
      // Predicated region
      $region29: #{tpu_custom_call.1} parent=5 // pred_check
        _
      $region30: #{tpu_custom_call.1} parent=5 // pred_check_branch
        %176 = sbr.rel (%p173) target = $region32
      $region31: #{tpu_custom_call.1} parent=5 // pred_region
        %s177 = ssub.s32 %s15, 1
        %s178 = sand.u32 %s84, 1
        %s179 = scalar_lea.sflag [#allocation3], %s178
        %s180 = sand.u32 %s84, 1
        %s181 = smul.addr %s180, 16
        %s182 = scalar_lea.vmem [#allocation2], %s181
        // Predicated region
        $region33: #{tpu_custom_call.1} parent=31 // pred_check
          %p183 = pneg %p97
        $region34: #{tpu_custom_call.1} parent=31 // pred_check_branch
          %185 = sbr.rel (%p183) target = $region36
        $region35: #{tpu_custom_call.1} parent=31 // pred_region
          %186 = dma.done %s179, 256
        $region36: #{tpu_custom_call.1} parent=31 // pred_fallthru
          _
        %p187 = pneg %p48
        %p188 = pneg %p45
        %p189 = pneg %p69
        %p190 = pneg %p66
        %s191 = sand.u32 %s84, 1
        %s192 = scalar_lea.sflag [#allocation3], %s191
        %s193 = sand.u32 %s84, 1
        %s194 = smul.addr %s193, 16
        %s195 = scalar_lea.vmem [#allocation2], %s194
        %p196 = pneg %p97
        %p197 = pneg %p94
        %p198 = pneg %p125
        %p199 = pneg %p122
        %s200 = sand.u32 %s112, 1
        %s201 = scalar_lea.sflag [#allocation4], %s200
        %s202 = sand.u32 %s112, 1
        %s203 = smul.addr %s202, 16
        %s204 = scalar_lea.vmem [#allocation5], %s203
        %s205 = smul.u32 2, %s25
        %s206 = smul.u32 2, %s25
        %v207 = vld [vmem:[%s182] sm:$0xff]
        %v208 = vld [vmem:[%s182 + $0x8] sm:$0xff]
        %v209 = vld [vmem:[%s0] sm:$0xff]
        %v210 = vld [vmem:[%s1] sm:$0xff]
        %212 = vset.pattern.permute.xlu0 0
        %213 = vperm.xlu0 %212, %v210
        %v214 = vpop.permute.xlu0 %213
        %vm216 = vcmask 64512
        %v218 = vsel %vm216, %v209, 0
        %220 = vmatprep.subr.mxu0 %v208
        %221 = vmatpush1.msra.mxu0 %v207
        %222 = vmatprep.subr.mxu0 0.0
        %223 = vmatpush1.msra.mxu0 0.0
        %224 = vmatprep.subr.mxu0 0.0
        %225 = vmatpush1.msra.mxu0 0.0
        %226 = vmatprep.subr.mxu0 0.0
        %227 = vmatpush1.msra.mxu0 0.0
        %228 = vmatprep.subr.mxu0 0.0
        %229 = vmatpush1.msra.mxu0 0.0
        %230 = vmatprep.subr.mxu0 0.0
        %231 = vmatpush1.msra.mxu0 0.0
        %232 = vmatprep.subr.mxu0 0.0
        %233 = vmatpush1.msra.mxu0 0.0
        %234 = vmatprep.subr.mxu0 0.0
        %235 = vmatpush1.msra.mxu0 0.0
        %236 = vmatprep.subr.mxu0 0.0
        %237 = vmatpush1.msra.mxu0 0.0
        %238 = vmatprep.subr.mxu0 0.0
        %239 = vmatpush1.msra.mxu0 0.0
        %240 = vmatprep.subr.mxu0 0.0
        %241 = vmatpush1.msra.mxu0 0.0
        %242 = vmatprep.subr.mxu0 0.0
        %243 = vmatpush1.msra.mxu0 0.0
        %244 = vmatprep.subr.mxu0 0.0
        %245 = vmatpush1.msra.mxu0 0.0
        %246 = vmatprep.subr.mxu0 0.0
        %247 = vmatpush1.msra.mxu0 0.0
        %248 = vmatprep.subr.mxu0 0.0
        %249 = vmatpush1.msra.mxu0 0.0
        %250 = vmatprep.subr.mxu0 0.0
        %251 = vmatpush1.msra.mxu0 0.0
        %252 = vmatprep.subr.mxu0 0.0
        %253 = vmatpush1.msra.mxu0 0.0
        %254 = vmatprep.subr.mxu0 0.0
        %255 = vmatpush1.msra.mxu0 0.0
        %256 = vmatprep.subr.mxu0 0.0
        %257 = vmatpush1.msra.mxu0 0.0
        %258 = vmatprep.subr.mxu0 0.0
        %259 = vmatpush1.msra.mxu0 0.0
        %260 = vmatprep.subr.mxu0 0.0
        %261 = vmatpush1.msra.mxu0 0.0
        %262 = vmatprep.subr.mxu0 0.0
        %263 = vmatpush1.msra.mxu0 0.0
        %264 = vmatprep.subr.mxu0 0.0
        %265 = vmatpush1.msra.mxu0 0.0
        %266 = vmatprep.subr.mxu0 0.0
        %267 = vmatpush1.msra.mxu0 0.0
        %268 = vmatprep.subr.mxu0 0.0
        %269 = vmatpush1.msra.mxu0 0.0
        %270 = vmatprep.subr.mxu0 0.0
        %271 = vmatpush1.msra.mxu0 0.0
        %272 = vmatprep.subr.mxu0 0.0
        %273 = vmatpush1.msra.mxu0 0.0
        %274 = vmatprep.subr.mxu0 0.0
        %275 = vmatpush1.msra.mxu0 0.0
        %276 = vmatprep.subr.mxu0 0.0
        %277 = vmatpush1.msra.mxu0 0.0
        %278 = vmatprep.subr.mxu0 0.0
        %279 = vmatpush1.msra.mxu0 0.0
        %280 = vmatprep.subr.mxu0 0.0
        %281 = vmatpush1.msra.mxu0 0.0
        %282 = vmatprep.subr.mxu0 0.0
        %283 = vmatpush1.msra.mxu0 0.0
        %284 = vmatprep.mubr.f32.mxu0 0.0
        %285 = vmatmul.mubr.f32.gmra.mrb[0].mxu0 %v218
        %v286 = vpop.f32.mrb[0].mxu0
        %v287 = vadd.f32 %v214, %v286
        %v288 = vpop.f32.mrb[0].mxu0
        %v289 = vadd.f32 %v214, %v288
        %290 = vdwg.mxu0
        %v291 = vmax.f32 %v287, 0.0
        %v292 = vmax.f32 %v289, 0.0
        %s293 = scalar_lea.vmem %s0, 8
        %v294 = vld [vmem:[%s293] sm:$0xff]
        %s295 = scalar_lea.vmem %s1, 8
        %v296 = vld [vmem:[%s295] sm:$0xff]
        %298 = vset.pattern.permute.xlu0 0
        %299 = vperm.xlu0 %298, %v296
        %v300 = vpop.permute.xlu0 %299
        %v303 = vsel %vm216, %v294, 0
        %305 = vmatprep.subr.mxu0 %v292
        %306 = vmatpush1.msra.mxu0 %v291
        %307 = vmatprep.subr.mxu0 0.0
        %308 = vmatpush1.msra.mxu0 0.0
        %309 = vmatprep.subr.mxu0 0.0
        %310 = vmatpush1.msra.mxu0 0.0
        %311 = vmatprep.subr.mxu0 0.0
        %312 = vmatpush1.msra.mxu0 0.0
        %313 = vmatprep.subr.mxu0 0.0
        %314 = vmatpush1.msra.mxu0 0.0
        %315 = vmatprep.subr.mxu0 0.0
        %316 = vmatpush1.msra.mxu0 0.0
        %317 = vmatprep.subr.mxu0 0.0
        %318 = vmatpush1.msra.mxu0 0.0
        %319 = vmatprep.subr.mxu0 0.0
        %320 = vmatpush1.msra.mxu0 0.0
        %321 = vmatprep.subr.mxu0 0.0
        %322 = vmatpush1.msra.mxu0 0.0
        %323 = vmatprep.subr.mxu0 0.0
        %324 = vmatpush1.msra.mxu0 0.0
        %325 = vmatprep.subr.mxu0 0.0
        %326 = vmatpush1.msra.mxu0 0.0
        %327 = vmatprep.subr.mxu0 0.0
        %328 = vmatpush1.msra.mxu0 0.0
        %329 = vmatprep.subr.mxu0 0.0
        %330 = vmatpush1.msra.mxu0 0.0
        %331 = vmatprep.subr.mxu0 0.0
        %332 = vmatpush1.msra.mxu0 0.0
        %333 = vmatprep.subr.mxu0 0.0
        %334 = vmatpush1.msra.mxu0 0.0
        %335 = vmatprep.subr.mxu0 0.0
        %336 = vmatpush1.msra.mxu0 0.0
        %337 = vmatprep.subr.mxu0 0.0
        %338 = vmatpush1.msra.mxu0 0.0
        %339 = vmatprep.subr.mxu0 0.0
        %340 = vmatpush1.msra.mxu0 0.0
        %341 = vmatprep.subr.mxu0 0.0
        %342 = vmatpush1.msra.mxu0 0.0
        %343 = vmatprep.subr.mxu0 0.0
        %344 = vmatpush1.msra.mxu0 0.0
        %345 = vmatprep.subr.mxu0 0.0
        %346 = vmatpush1.msra.mxu0 0.0
        %347 = vmatprep.subr.mxu0 0.0
        %348 = vmatpush1.msra.mxu0 0.0
        %349 = vmatprep.subr.mxu0 0.0
        %350 = vmatpush1.msra.mxu0 0.0
        %351 = vmatprep.subr.mxu0 0.0
        %352 = vmatpush1.msra.mxu0 0.0
        %353 = vmatprep.subr.mxu0 0.0
        %354 = vmatpush1.msra.mxu0 0.0
        %355 = vmatprep.subr.mxu0 0.0
        %356 = vmatpush1.msra.mxu0 0.0
        %357 = vmatprep.subr.mxu0 0.0
        %358 = vmatpush1.msra.mxu0 0.0
        %359 = vmatprep.subr.mxu0 0.0
        %360 = vmatpush1.msra.mxu0 0.0
        %361 = vmatprep.subr.mxu0 0.0
        %362 = vmatpush1.msra.mxu0 0.0
        %363 = vmatprep.subr.mxu0 0.0
        %364 = vmatpush1.msra.mxu0 0.0
        %365 = vmatprep.subr.mxu0 0.0
        %366 = vmatpush1.msra.mxu0 0.0
        %367 = vmatprep.subr.mxu0 0.0
        %368 = vmatpush1.msra.mxu0 0.0
        %369 = vmatprep.mubr.f32.mxu0 0.0
        %370 = vmatmul.mubr.f32.gmra.mrb[0].mxu0 %v303
        %v371 = vpop.f32.mrb[0].mxu0
        %v372 = vadd.f32 %v300, %v371
        %v373 = vpop.f32.mrb[0].mxu0
        %v374 = vadd.f32 %v300, %v373
        %375 = vdwg.mxu0
        %v376 = vmax.f32 %v372, 0.0
        %v377 = vmax.f32 %v374, 0.0
        %s378 = scalar_lea.vmem %s0, 16
        %v379 = vld [vmem:[%s378] sm:$0xff]
        %s380 = scalar_lea.vmem %s1, 16
        %v381 = vld [vmem:[%s380] sm:$0xff]
        %383 = vset.pattern.permute.xlu0 0
        %384 = vperm.xlu0 %383, %v381
        %v385 = vpop.permute.xlu0 %384
        %v388 = vsel %vm216, %v379, 0
        %390 = vmatprep.subr.mxu0 %v377
        %391 = vmatpush1.msra.mxu0 %v376
        %392 = vmatprep.subr.mxu0 0.0
        %393 = vmatpush1.msra.mxu0 0.0
        %394 = vmatprep.subr.mxu0 0.0
        %395 = vmatpush1.msra.mxu0 0.0
        %396 = vmatprep.subr.mxu0 0.0
        %397 = vmatpush1.msra.mxu0 0.0
        %398 = vmatprep.subr.mxu0 0.0
        %399 = vmatpush1.msra.mxu0 0.0
        %400 = vmatprep.subr.mxu0 0.0
        %401 = vmatpush1.msra.mxu0 0.0
        %402 = vmatprep.subr.mxu0 0.0
        %403 = vmatpush1.msra.mxu0 0.0
        %404 = vmatprep.subr.mxu0 0.0
        %405 = vmatpush1.msra.mxu0 0.0
        %406 = vmatprep.subr.mxu0 0.0
        %407 = vmatpush1.msra.mxu0 0.0
        %408 = vmatprep.subr.mxu0 0.0
        %409 = vmatpush1.msra.mxu0 0.0
        %410 = vmatprep.subr.mxu0 0.0
        %411 = vmatpush1.msra.mxu0 0.0
        %412 = vmatprep.subr.mxu0 0.0
        %413 = vmatpush1.msra.mxu0 0.0
        %414 = vmatprep.subr.mxu0 0.0
        %415 = vmatpush1.msra.mxu0 0.0
        %416 = vmatprep.subr.mxu0 0.0
        %417 = vmatpush1.msra.mxu0 0.0
        %418 = vmatprep.subr.mxu0 0.0
        %419 = vmatpush1.msra.mxu0 0.0
        %420 = vmatprep.subr.mxu0 0.0
        %421 = vmatpush1.msra.mxu0 0.0
        %422 = vmatprep.subr.mxu0 0.0
        %423 = vmatpush1.msra.mxu0 0.0
        %424 = vmatprep.subr.mxu0 0.0
        %425 = vmatpush1.msra.mxu0 0.0
        %426 = vmatprep.subr.mxu0 0.0
        %427 = vmatpush1.msra.mxu0 0.0
        %428 = vmatprep.subr.mxu0 0.0
        %429 = vmatpush1.msra.mxu0 0.0
        %430 = vmatprep.subr.mxu0 0.0
        %431 = vmatpush1.msra.mxu0 0.0
        %432 = vmatprep.subr.mxu0 0.0
        %433 = vmatpush1.msra.mxu0 0.0
        %434 = vmatprep.subr.mxu0 0.0
        %435 = vmatpush1.msra.mxu0 0.0
        %436 = vmatprep.subr.mxu0 0.0
        %437 = vmatpush1.msra.mxu0 0.0
        %438 = vmatprep.subr.mxu0 0.0
        %439 = vmatpush1.msra.mxu0 0.0
        %440 = vmatprep.subr.mxu0 0.0
        %441 = vmatpush1.msra.mxu0 0.0
        %442 = vmatprep.subr.mxu0 0.0
        %443 = vmatpush1.msra.mxu0 0.0
        %444 = vmatprep.subr.mxu0 0.0
        %445 = vmatpush1.msra.mxu0 0.0
        %446 = vmatprep.subr.mxu0 0.0
        %447 = vmatpush1.msra.mxu0 0.0
        %448 = vmatprep.subr.mxu0 0.0
        %449 = vmatpush1.msra.mxu0 0.0
        %450 = vmatprep.subr.mxu0 0.0
        %451 = vmatpush1.msra.mxu0 0.0
        %452 = vmatprep.subr.mxu0 0.0
        %453 = vmatpush1.msra.mxu0 0.0
        %454 = vmatprep.mubr.f32.mxu0 0.0
        %455 = vmatmul.mubr.f32.gmra.mrb[0].mxu0 %v388
        %v456 = vpop.f32.mrb[0].mxu0
        %v457 = vadd.f32 %v385, %v456
        %v458 = vpop.f32.mrb[0].mxu0
        %v459 = vadd.f32 %v385, %v458
        %460 = vdwg.mxu0
        %v461 = vmax.f32 %v457, 0.0
        %v462 = vmax.f32 %v459, 0.0
        %v463 = vadd.f32 %v461, %v207
        %v464 = vadd.f32 %v462, %v208
        %s465 = scalar_lea.vmem %s0, 24
        %v466 = vld [vmem:[%s465] sm:$0xff]
        %s467 = scalar_lea.vmem %s1, 24
        %v468 = vld [vmem:[%s467] sm:$0xff]
        %470 = vset.pattern.permute.xlu0 0
        %471 = vperm.xlu0 %470, %v468
        %v472 = vpop.permute.xlu0 %471
        %v475 = vsel %vm216, %v466, 0
        %477 = vmatprep.subr.mxu0 %v464
        %478 = vmatpush1.msra.mxu0 %v463
        %479 = vmatprep.subr.mxu0 0.0
        %480 = vmatpush1.msra.mxu0 0.0
        %481 = vmatprep.subr.mxu0 0.0
        %482 = vmatpush1.msra.mxu0 0.0
        %483 = vmatprep.subr.mxu0 0.0
        %484 = vmatpush1.msra.mxu0 0.0
        %485 = vmatprep.subr.mxu0 0.0
        %486 = vmatpush1.msra.mxu0 0.0
        %487 = vmatprep.subr.mxu0 0.0
        %488 = vmatpush1.msra.mxu0 0.0
        %489 = vmatprep.subr.mxu0 0.0
        %490 = vmatpush1.msra.mxu0 0.0
        %491 = vmatprep.subr.mxu0 0.0
        %492 = vmatpush1.msra.mxu0 0.0
        %493 = vmatprep.subr.mxu0 0.0
        %494 = vmatpush1.msra.mxu0 0.0
        %495 = vmatprep.subr.mxu0 0.0
        %496 = vmatpush1.msra.mxu0 0.0
        %497 = vmatprep.subr.mxu0 0.0
        %498 = vmatpush1.msra.mxu0 0.0
        %499 = vmatprep.subr.mxu0 0.0
        %500 = vmatpush1.msra.mxu0 0.0
        %501 = vmatprep.subr.mxu0 0.0
        %502 = vmatpush1.msra.mxu0 0.0
        %503 = vmatprep.subr.mxu0 0.0
        %504 = vmatpush1.msra.mxu0 0.0
        %505 = vmatprep.subr.mxu0 0.0
        %506 = vmatpush1.msra.mxu0 0.0
        %507 = vmatprep.subr.mxu0 0.0
        %508 = vmatpush1.msra.mxu0 0.0
        %509 = vmatprep.subr.mxu0 0.0
        %510 = vmatpush1.msra.mxu0 0.0
        %511 = vmatprep.subr.mxu0 0.0
        %512 = vmatpush1.msra.mxu0 0.0
        %513 = vmatprep.subr.mxu0 0.0
        %514 = vmatpush1.msra.mxu0 0.0
        %515 = vmatprep.subr.mxu0 0.0
        %516 = vmatpush1.msra.mxu0 0.0
        %517 = vmatprep.subr.mxu0 0.0
        %518 = vmatpush1.msra.mxu0 0.0
        %519 = vmatprep.subr.mxu0 0.0
        %520 = vmatpush1.msra.mxu0 0.0
        %521 = vmatprep.subr.mxu0 0.0
        %522 = vmatpush1.msra.mxu0 0.0
        %523 = vmatprep.subr.mxu0 0.0
        %524 = vmatpush1.msra.mxu0 0.0
        %525 = vmatprep.subr.mxu0 0.0
        %526 = vmatpush1.msra.mxu0 0.0
        %527 = vmatprep.subr.mxu0 0.0
        %528 = vmatpush1.msra.mxu0 0.0
        %529 = vmatprep.subr.mxu0 0.0
        %530 = vmatpush1.msra.mxu0 0.0
        %531 = vmatprep.subr.mxu0 0.0
        %532 = vmatpush1.msra.mxu0 0.0
        %533 = vmatprep.subr.mxu0 0.0
        %534 = vmatpush1.msra.mxu0 0.0
        %535 = vmatprep.subr.mxu0 0.0
        %536 = vmatpush1.msra.mxu0 0.0
        %537 = vmatprep.subr.mxu0 0.0
        %538 = vmatpush1.msra.mxu0 0.0
        %539 = vmatprep.subr.mxu0 0.0
        %540 = vmatpush1.msra.mxu0 0.0
        %541 = vmatprep.mubr.f32.mxu0 0.0
        %542 = vmatmul.mubr.f32.gmra.mrb[0].mxu0 %v475
        %v543 = vpop.f32.mrb[0].mxu0
        %v544 = vadd.f32 %v472, %v543
        %v545 = vpop.f32.mrb[0].mxu0
        %v546 = vadd.f32 %v472, %v545
        %547 = vdwg.mxu0
        %v548 = vmax.f32 %v544, 0.0
        %v549 = vmax.f32 %v546, 0.0
        %s550 = scalar_lea.vmem %s0, 32
        %v551 = vld [vmem:[%s550] sm:$0xff]
        %s552 = scalar_lea.vmem %s1, 32
        %v553 = vld [vmem:[%s552] sm:$0xff]
        %555 = vset.pattern.permute.xlu0 0
        %556 = vperm.xlu0 %555, %v553
        %v557 = vpop.permute.xlu0 %556
        %v560 = vsel %vm216, %v551, 0
        %562 = vmatprep.subr.mxu0 %v549
        %563 = vmatpush1.msra.mxu0 %v548
        %564 = vmatprep.subr.mxu0 0.0
        %565 = vmatpush1.msra.mxu0 0.0
        %566 = vmatprep.subr.mxu0 0.0
        %567 = vmatpush1.msra.mxu0 0.0
        %568 = vmatprep.subr.mxu0 0.0
        %569 = vmatpush1.msra.mxu0 0.0
        %570 = vmatprep.subr.mxu0 0.0
        %571 = vmatpush1.msra.mxu0 0.0
        %572 = vmatprep.subr.mxu0 0.0
        %573 = vmatpush1.msra.mxu0 0.0
        %574 = vmatprep.subr.mxu0 0.0
        %575 = vmatpush1.msra.mxu0 0.0
        %576 = vmatprep.subr.mxu0 0.0
        %577 = vmatpush1.msra.mxu0 0.0
        %578 = vmatprep.subr.mxu0 0.0
        %579 = vmatpush1.msra.mxu0 0.0
        %580 = vmatprep.subr.mxu0 0.0
        %581 = vmatpush1.msra.mxu0 0.0
        %582 = vmatprep.subr.mxu0 0.0
        %583 = vmatpush1.msra.mxu0 0.0
        %584 = vmatprep.subr.mxu0 0.0
        %585 = vmatpush1.msra.mxu0 0.0
        %586 = vmatprep.subr.mxu0 0.0
        %587 = vmatpush1.msra.mxu0 0.0
        %588 = vmatprep.subr.mxu0 0.0
        %589 = vmatpush1.msra.mxu0 0.0
        %590 = vmatprep.subr.mxu0 0.0
        %591 = vmatpush1.msra.mxu0 0.0
        %592 = vmatprep.subr.mxu0 0.0
        %593 = vmatpush1.msra.mxu0 0.0
        %594 = vmatprep.subr.mxu0 0.0
        %595 = vmatpush1.msra.mxu0 0.0
        %596 = vmatprep.subr.mxu0 0.0
        %597 = vmatpush1.msra.mxu0 0.0
        %598 = vmatprep.subr.mxu0 0.0
        %599 = vmatpush1.msra.mxu0 0.0
        %600 = vmatprep.subr.mxu0 0.0
        %601 = vmatpush1.msra.mxu0 0.0
        %602 = vmatprep.subr.mxu0 0.0
        %603 = vmatpush1.msra.mxu0 0.0
        %604 = vmatprep.subr.mxu0 0.0
        %605 = vmatpush1.msra.mxu0 0.0
        %606 = vmatprep.subr.mxu0 0.0
        %607 = vmatpush1.msra.mxu0 0.0
        %608 = vmatprep.subr.mxu0 0.0
        %609 = vmatpush1.msra.mxu0 0.0
        %610 = vmatprep.subr.mxu0 0.0
        %611 = vmatpush1.msra.mxu0 0.0
        %612 = vmatprep.subr.mxu0 0.0
        %613 = vmatpush1.msra.mxu0 0.0
        %614 = vmatprep.subr.mxu0 0.0
        %615 = vmatpush1.msra.mxu0 0.0
        %616 = vmatprep.subr.mxu0 0.0
        %617 = vmatpush1.msra.mxu0 0.0
        %618 = vmatprep.subr.mxu0 0.0
        %619 = vmatpush1.msra.mxu0 0.0
        %620 = vmatprep.subr.mxu0 0.0
        %621 = vmatpush1.msra.mxu0 0.0
        %622 = vmatprep.subr.mxu0 0.0
        %623 = vmatpush1.msra.mxu0 0.0
        %624 = vmatprep.subr.mxu0 0.0
        %625 = vmatpush1.msra.mxu0 0.0
        %626 = vmatprep.mubr.f32.mxu0 0.0
        %627 = vmatmul.mubr.f32.gmra.mrb[0].mxu0 %v560
        %v628 = vpop.f32.mrb[0].mxu0
        %v629 = vadd.f32 %v557, %v628
        %v630 = vpop.f32.mrb[0].mxu0
        %v631 = vadd.f32 %v557, %v630
        %632 = vdwg.mxu0
        %v633 = vmax.f32 %v629, 0.0
        %v634 = vmax.f32 %v631, 0.0
        %s635 = scalar_lea.vmem %s0, 40
        %v636 = vld [vmem:[%s635] sm:$0xff]
        %s637 = scalar_lea.vmem %s1, 40
        %v638 = vld [vmem:[%s637] sm:$0xff]
        %640 = vset.pattern.permute.xlu0 0
        %641 = vperm.xlu0 %640, %v638
        %v642 = vpop.permute.xlu0 %641
        %v645 = vsel %vm216, %v636, 0
        %647 = vmatprep.subr.mxu0 %v634
        %648 = vmatpush1.msra.mxu0 %v633
        %649 = vmatprep.subr.mxu0 0.0
        %650 = vmatpush1.msra.mxu0 0.0
        %651 = vmatprep.subr.mxu0 0.0
        %652 = vmatpush1.msra.mxu0 0.0
        %653 = vmatprep.subr.mxu0 0.0
        %654 = vmatpush1.msra.mxu0 0.0
        %655 = vmatprep.subr.mxu0 0.0
        %656 = vmatpush1.msra.mxu0 0.0
        %657 = vmatprep.subr.mxu0 0.0
        %658 = vmatpush1.msra.mxu0 0.0
        %659 = vmatprep.subr.mxu0 0.0
        %660 = vmatpush1.msra.mxu0 0.0
        %661 = vmatprep.subr.mxu0 0.0
        %662 = vmatpush1.msra.mxu0 0.0
        %663 = vmatprep.subr.mxu0 0.0
        %664 = vmatpush1.msra.mxu0 0.0
        %665 = vmatprep.subr.mxu0 0.0
        %666 = vmatpush1.msra.mxu0 0.0
        %667 = vmatprep.subr.mxu0 0.0
        %668 = vmatpush1.msra.mxu0 0.0
        %669 = vmatprep.subr.mxu0 0.0
        %670 = vmatpush1.msra.mxu0 0.0
        %671 = vmatprep.subr.mxu0 0.0
        %672 = vmatpush1.msra.mxu0 0.0
        %673 = vmatprep.subr.mxu0 0.0
        %674 = vmatpush1.msra.mxu0 0.0
        %675 = vmatprep.subr.mxu0 0.0
        %676 = vmatpush1.msra.mxu0 0.0
        %677 = vmatprep.subr.mxu0 0.0
        %678 = vmatpush1.msra.mxu0 0.0
        %679 = vmatprep.subr.mxu0 0.0
        %680 = vmatpush1.msra.mxu0 0.0
        %681 = vmatprep.subr.mxu0 0.0
        %682 = vmatpush1.msra.mxu0 0.0
        %683 = vmatprep.subr.mxu0 0.0
        %684 = vmatpush1.msra.mxu0 0.0
        %685 = vmatprep.subr.mxu0 0.0
        %686 = vmatpush1.msra.mxu0 0.0
        %687 = vmatprep.subr.mxu0 0.0
        %688 = vmatpush1.msra.mxu0 0.0
        %689 = vmatprep.subr.mxu0 0.0
        %690 = vmatpush1.msra.mxu0 0.0
        %691 = vmatprep.subr.mxu0 0.0
        %692 = vmatpush1.msra.mxu0 0.0
        %693 = vmatprep.subr.mxu0 0.0
        %694 = vmatpush1.msra.mxu0 0.0
        %695 = vmatprep.subr.mxu0 0.0
        %696 = vmatpush1.msra.mxu0 0.0
        %697 = vmatprep.subr.mxu0 0.0
        %698 = vmatpush1.msra.mxu0 0.0
        %699 = vmatprep.subr.mxu0 0.0
        %700 = vmatpush1.msra.mxu0 0.0
        %701 = vmatprep.subr.mxu0 0.0
        %702 = vmatpush1.msra.mxu0 0.0
        %703 = vmatprep.subr.mxu0 0.0
        %704 = vmatpush1.msra.mxu0 0.0
        %705 = vmatprep.subr.mxu0 0.0
        %706 = vmatpush1.msra.mxu0 0.0
        %707 = vmatprep.subr.mxu0 0.0
        %708 = vmatpush1.msra.mxu0 0.0
        %709 = vmatprep.subr.mxu0 0.0
        %710 = vmatpush1.msra.mxu0 0.0
        %711 = vmatprep.mubr.f32.mxu0 0.0
        %712 = vmatmul.mubr.f32.gmra.mrb[0].mxu0 %v645
        %v713 = vpop.f32.mrb[0].mxu0
        %v714 = vadd.f32 %v642, %v713
        %v715 = vpop.f32.mrb[0].mxu0
        %v716 = vadd.f32 %v642, %v715
        %717 = vdwg.mxu0
        %v718 = vmax.f32 %v714, 0.0
        %v719 = vmax.f32 %v716, 0.0
        %v720 = vadd.f32 %v718, %v463
        %v721 = vadd.f32 %v719, %v464
        %722 = vst [vmem:[%s204] sm:$0xff] %v720
        %723 = vst [vmem:[%s204 + $0x8] sm:$0xff] %v721
        %s724 = sand.u32 %s112, 1
        %s725 = scalar_lea.sflag [#allocation4], %s724
        %s726 = sand.u32 %s112, 1
        %s727 = smul.addr %s726, 16
        %s728 = scalar_lea.vmem [#allocation5], %s727
        // Predicated region
        $region37: #{tpu_custom_call.1} parent=31 // pred_check
          %p729 = pneg %p122
        $region38: #{tpu_custom_call.1} parent=31 // pred_check_branch
          %731 = sbr.rel (%p729) target = $region40
        $region39: #{tpu_custom_call.1} parent=31 // pred_region
          %s732 = smul.u32 2, %s25
          %s734 = ssub.s32 256, 256
          %735 = vsyncadd %s725, %s734
          %s736 = smul.addr %s24, 2
          %s737 = sadd.s32 %s732, %s736
          %s738 = smul.addr %s737, 128
          %s739 = scalar_lea.hbm %s3, %s738
          %s741 = sshll.u32 %s728, 4
          %s742 = int_to_ptr.vmem [resolvable:$true] %s741
          %744 = dma.vmem_to_hbm [thread:$0]  %s742, 256, %s739, %s725
        $region40: #{tpu_custom_call.1} parent=31 // pred_fallthru
          _
      $region32: #{tpu_custom_call.1} parent=5 // pred_fallthru
        _
      %p745 = scmp.le.s32.totalorder 2, %s15
      // Predicated region
      $region41: #{tpu_custom_call.1} parent=5 // pred_check
        %p746 = pneg %p745
      $region42: #{tpu_custom_call.1} parent=5 // pred_check_branch
        %748 = sbr.rel (%p746) target = $region44
      $region43: #{tpu_custom_call.1} parent=5 // pred_region
        %s749 = ssub.s32 %s15, 2
        // Predicated region
        $region45: #{tpu_custom_call.1} parent=43 // pred_check
          %p750 = pneg %p128
        $region46: #{tpu_custom_call.1} parent=43 // pred_check_branch
          %752 = sbr.rel (%p750) target = $region48
        $region47: #{tpu_custom_call.1} parent=43 // pred_region
          %s753 = sand.u32 %s113, 1
          %s754 = scalar_lea.sflag [#allocation4], %s753
          %s755 = sand.u32 %s113, 1
          %s756 = smul.addr %s755, 16
          %s757 = scalar_lea.vmem [#allocation5], %s756
          %758 = dma.done %s754, 256
        $region48: #{tpu_custom_call.1} parent=43 // pred_fallthru
          _
      $region44: #{tpu_custom_call.1} parent=5 // pred_fallthru
        _
    $region6: #{tpu_custom_call.1} parent=1 // loop_footer
      %s19 = sadd.s32 1, %s15
    $region7: #{tpu_custom_call.1} parent=1 // loop_footer_branch
      %14 = sbr.rel target = $region3
    $region8: #{tpu_custom_call.1} parent=1 // loop_exit
      _
    %759 = vsyncpa [#allocation3], 1
    %s760 = scalar_lea.sflag [#allocation3], 1
    %761 = vsyncpa %s760, 1
    %762 = vsyncpa [#allocation4], 1
    %s763 = scalar_lea.sflag [#allocation4], 1
    %764 = vsyncpa %s763, 1

// kernel: tpu_custom_call.1
$region0: #{tpu_custom_call.1}
  #allocation0 [shape = 'u32[]', space=smem, size = 0x4, offset = 0x4, fixed_abs, tag = 'smem constant byte address 0x4 - core index']
  #allocation1 [shape = 'u32[144,128]{1,0:T(1,128)}', space=vmem, size = 0x12000, scoped, tag = 'internal scratch']
  %s0 = inlined_call_operand.vmem [shape: f32[6,8,8], index: 0, kind: input, shape index: {}]
  %s1 = inlined_call_operand.vmem [shape: f32[6,8,1], index: 1, kind: input, shape index: {}]
  %s2 = inlined_call_operand.hbm [shape: f32[2,8,256], index: 2, kind: input, shape index: {}]
  %s3 = inlined_call_operand.hbm [shape: f32[2,8,256], index: 3, kind: output, shape index: {}]
  %s4 = sld [smem:[#allocation0]]
  $region49: #{tpu_custom_call.1} parent=0
    _
  %s6 = ssub.s32 1, %s4
  %s7 = scalar_select 0, %s6, %s4
  $region1: #{tpu_custom_call.1} parent=0
    #allocation2 [shape = 'u8[16384]{0}', space=vmem, size = 0x4000, scoped, tag = 'input window, operand 2']
    #allocation3 [shape = 's32[2]{0}', space=sflag, size = 0x8, scoped, tag = 'scoped memory for tpu_custom_call.1']
    #allocation4 [shape = 's32[2]{0}', space=sflag, size = 0x8, scoped, tag = 'scoped memory for tpu_custom_call.1']
    #allocation5 [shape = 'u8[16384]{0}', space=vmem, size = 0x4000, scoped, tag = 'output window, operand 0']
    %8 = vsyncpa [#allocation3], 0
    %s9 = scalar_lea.sflag [#allocation3], 1
    %10 = vsyncpa %s9, 0
    %11 = vsyncpa [#allocation4], 0
    %s12 = scalar_lea.sflag [#allocation4], 1
    %13 = vsyncpa %s12, 0
    loop: start=0, step=1, limit=4
    $region2: #{tpu_custom_call.1} parent=1 // loop_pre_header
      _
    $region3: #{tpu_custom_call.1} parent=1 // loop_header
      %s15 = sphi 0, %s19
      %p16 = scmp.ge.s32.totalorder %s15, 4
      %s22 = sphi 0, %s34
      %s23 = sphi 0, %s30
      %s24 = sphi 0, %s22
      %s25 = sphi 0, %s23
      %s26 = sphi 0, %s24
      %s27 = sphi 0, %s25
      %s35 = sphi 0, %s35
      %s37 = sphi 0, %s35
      %s38 = sphi 0, %s37
      %s52 = sphi 0, %s38
      %s56 = sphi 0, %s56
      %s58 = sphi 0, %s56
      %s59 = sphi 0, %s58
      %s73 = sphi 0, %s59
      %s81 = sphi 0, %s83
      %s84 = sphi 0, %s81
      %s85 = sphi 0, %s84
      %s101 = sphi 0, %s85
      %s109 = sphi 0, %s111
      %s112 = sphi 0, %s109
      %s113 = sphi 0, %s112
      %s129 = sphi 0, %s113
    $region4: #{tpu_custom_call.1} parent=1 // loop_header_branch
      %18 = sbr.rel (%p16) target = $region8
    $region5: #{tpu_custom_call.1} parent=1 // loop_body
      %s20 = ssub.s32 %s15, 1
      %s21 = ssub.s32 %s15, 2
      %s28 = sadd.s32 1, %s23
      %p29 = scmp.ge.s32.totalorder %s28, 1
      %s30 = scalar_select %p29, 0, %s28
      %s31 = sadd.s32 1, %s22
      %s32 = scalar_select %p29, %s31, %s22
      %p33 = scmp.ge.s32.totalorder %s32, 2
      %s34 = scalar_select %p33, 0, %s32
      %s36 = sadd.s32 %s35, 1
      %p39 = scmp.eq.s32.totalorder %s15, 1
      %p40 = scmp.ne.s32.totalorder %s35, %s37
      %p41 = scmp.eq.s32.totalorder %s15, 0
      %p42 = por %p40, %p41
      %p43 = scmp.ne.s32.totalorder %s35, %s37
      %p44 = scmp.eq.s32.totalorder %s20, 1
      %p45 = por %p43, %p44
      %p46 = scmp.ne.s32.totalorder %s37, %s38
      %p47 = scmp.eq.s32.totalorder %s20, 0
      %p48 = por %p46, %p47
      %p49 = scmp.ne.s32.totalorder %s37, %s38
      %p50 = scmp.eq.s32.totalorder %s21, 1
      %p51 = por %p49, %p50
      %p53 = scmp.ne.s32.totalorder %s38, %s52
      %p54 = scmp.eq.s32.totalorder %s21, 0
      %p55 = por %p53, %p54
      %s57 = sadd.s32 %s56, 1
      %p60 = scmp.eq.s32.totalorder %s15, 1
      %p61 = scmp.ne.s32.totalorder %s56, %s58
      %p62 = scmp.eq.s32.totalorder %s15, 0
      %p63 = por %p61, %p62
      %p64 = scmp.ne.s32.totalorder %s56, %s58
      %p65 = scmp.eq.s32.totalorder %s20, 1
      %p66 = por %p64, %p65
      %p67 = scmp.ne.s32.totalorder %s58, %s59
      %p68 = scmp.eq.s32.totalorder %s20, 0
      %p69 = por %p67, %p68
      %p70 = scmp.ne.s32.totalorder %s58, %s59
      %p71 = scmp.eq.s32.totalorder %s21, 1
      %p72 = por %p70, %p71
      %p74 = scmp.ne.s32.totalorder %s59, %s73
      %p75 = scmp.eq.s32.totalorder %s21, 0
      %p76 = por %p74, %p75
      %s77 = ssub.s32 %s22, %s34
      %s78 = ssub.s32 %s23, %s30
      %s79 = sor.u32 %s77, %s78
      %p80 = scmp.eq.s32.totalorder %s79, 0
      %s82 = sadd.s32 %s81, 1
      %s83 = scalar_select %p80, %s81, %s82
      %p86 = pneg %p80
      %p87 = scmp.eq.s32.totalorder %s15, 1
      %p88 = por %p86, %p87
      %p89 = scmp.ne.s32.totalorder %s81, %s84
      %p90 = scmp.eq.s32.totalorder %s15, 0
      %p91 = por %p89, %p90
      %p92 = scmp.ne.s32.totalorder %s81, %s84
      %p93 = scmp.eq.s32.totalorder %s20, 1
      %p94 = por %p92, %p93
      %p95 = scmp.ne.s32.totalorder %s84, %s85
      %p96 = scmp.eq.s32.totalorder %s20, 0
      %p97 = por %p95, %p96
      %p98 = scmp.ne.s32.totalorder %s84, %s85
      %p99 = scmp.eq.s32.totalorder %s21, 1
      %p100 = por %p98, %p99
      %p102 = scmp.ne.s32.totalorder %s85, %s101
      %p103 = scmp.eq.s32.totalorder %s21, 0
      %p104 = por %p102, %p103
      %s105 = ssub.s32 %s22, %s34
      %s106 = ssub.s32 %s23, %s30
      %s107 = sor.u32 %s105, %s106
      %p108 = scmp.eq.s32.totalorder %s107, 0
      %s110 = sadd.s32 %s109, 1
      %s111 = scalar_select %p108, %s109, %s110
      %p114 = pneg %p108
      %p115 = scmp.eq.s32.totalorder %s15, 1
      %p116 = por %p114, %p115
      %p117 = scmp.ne.s32.totalorder %s109, %s112
      %p118 = scmp.eq.s32.totalorder %s15, 0
      %p119 = por %p117, %p118
      %p120 = scmp.ne.s32.totalorder %s109, %s112
      %p121 = scmp.eq.s32.totalorder %s20, 1
      %p122 = por %p120, %p121
      %p123 = scmp.ne.s32.totalorder %s112, %s113
      %p124 = scmp.eq.s32.totalorder %s20, 0
      %p125 = por %p123, %p124
      %p126 = scmp.ne.s32.totalorder %s112, %s113
      %p127 = scmp.eq.s32.totalorder %s21, 1
      %p128 = por %p126, %p127
      %p130 = scmp.ne.s32.totalorder %s113, %s129
      %p131 = scmp.eq.s32.totalorder %s21, 0
      %p132 = por %p130, %p131
      %p133 = scmp.le.s32.totalorder 1, %s15
      %p134 = scmp.lt.s32.totalorder %s15, 3
      %p135 = pnand %p133, %p134
      %p136 = pneg %p135
      // Predicated region
      $region9: #{tpu_custom_call.1} parent=5 // pred_check
        _
      $region10: #{tpu_custom_call.1} parent=5 // pred_check_branch
        %138 = sbr.rel (%p135) target = $region12
      $region11: #{tpu_custom_call.1} parent=5 // pred_region
        %s139 = ssub.s32 %s15, 1
        // Predicated region
        $region13: #{tpu_custom_call.1} parent=11 // pred_check
          %p140 = pneg %p48
        $region14: #{tpu_custom_call.1} parent=11 // pred_check_branch
          %142 = sbr.rel (%p140) target = $region16
        $region15: #{tpu_custom_call.1} parent=11 // pred_region
          _
        $region16: #{tpu_custom_call.1} parent=11 // pred_fallthru
          _
        // Predicated region
        $region17: #{tpu_custom_call.1} parent=11 // pred_check
          %p143 = pneg %p69
        $region18: #{tpu_custom_call.1} parent=11 // pred_check_branch
          %145 = sbr.rel (%p143) target = $region20
        $region19: #{tpu_custom_call.1} parent=11 // pred_region
          _
        $region20: #{tpu_custom_call.1} parent=11 // pred_fallthru
          _
      $region12: #{tpu_custom_call.1} parent=5 // pred_fallthru
        _
      %p146 = scmp.lt.s32.totalorder %s15, 2
      // Predicated region
      $region21: #{tpu_custom_call.1} parent=5 // pred_check
        %p147 = pneg %p146
      $region22: #{tpu_custom_call.1} parent=5 // pred_check_branch
        %149 = sbr.rel (%p147) target = $region24
      $region23: #{tpu_custom_call.1} parent=5 // pred_region
        // Predicated region
        $region25: #{tpu_custom_call.1} parent=23 // pred_check
          %p150 = pneg %p91
        $region26: #{tpu_custom_call.1} parent=23 // pred_check_branch
          %152 = sbr.rel (%p150) target = $region28
        $region27: #{tpu_custom_call.1} parent=23 // pred_region
          %s153 = sand.u32 %s81, 1
          %s154 = scalar_lea.sflag [#allocation3], %s153
          %s155 = sand.u32 %s81, 1
          %s156 = smul.addr %s155, 16
          %s157 = scalar_lea.vmem [#allocation2], %s156
          %s158 = smul.u32 2, %s23
          %s160 = ssub.s32 256, 256
          %161 = vsyncadd %s154, %s160
          %s162 = smul.addr %s22, 2
          %s163 = sadd.s32 %s158, %s162
          %s164 = smul.addr %s163, 128
          %s165 = scalar_lea.hbm %s2, %s164
          %s167 = sshll.u32 %s157, 4
          %s168 = int_to_ptr.vmem [resolvable:$true] %s167
          %170 = dma.hbm_to_vmem [thread:$0]  %s165, 256, %s168, %s154
        $region28: #{tpu_custom_call.1} parent=23 // pred_fallthru
          _
      $region24: #{tpu_custom_call.1} parent=5 // pred_fallthru
        _
      %p171 = scmp.le.s32.totalorder 1, %s15
      %p172 = scmp.lt.s32.totalorder %s15, 3
      %p173 = pnand %p171, %p172
      %p174 = pneg %p173
      // Predicated region
      $region29: #{tpu_custom_call.1} parent=5 // pred_check
        _
      $region30: #{tpu_custom_call.1} parent=5 // pred_check_branch
        %176 = sbr.rel (%p173) target = $region32
      $region31: #{tpu_custom_call.1} parent=5 // pred_region
        %s177 = ssub.s32 %s15, 1
        %s178 = sand.u32 %s84, 1
        %s179 = scalar_lea.sflag [#allocation3], %s178
        %s180 = sand.u32 %s84, 1
        %s181 = smul.addr %s180, 16
        %s182 = scalar_lea.vmem [#allocation2], %s181
        // Predicated region
        $region33: #{tpu_custom_call.1} parent=31 // pred_check
          %p183 = pneg %p97
        $region34: #{tpu_custom_call.1} parent=31 // pred_check_branch
          %185 = sbr.rel (%p183) target = $region36
        $region35: #{tpu_custom_call.1} parent=31 // pred_region
          %186 = dma.done %s179, 256
        $region36: #{tpu_custom_call.1} parent=31 // pred_fallthru
          _
        %p187 = pneg %p48
        %p188 = pneg %p45
        %p189 = pneg %p69
        %p190 = pneg %p66
        %s191 = sand.u32 %s84, 1
        %s192 = scalar_lea.sflag [#allocation3], %s191
        %s193 = sand.u32 %s84, 1
        %s194 = smul.addr %s193, 16
        %s195 = scalar_lea.vmem [#allocation2], %s194
        %p196 = pneg %p97
        %p197 = pneg %p94
        %p198 = pneg %p125
        %p199 = pneg %p122
        %s200 = sand.u32 %s112, 1
        %s201 = scalar_lea.sflag [#allocation4], %s200
        %s202 = sand.u32 %s112, 1
        %s203 = smul.addr %s202, 16
        %s204 = scalar_lea.vmem [#allocation5], %s203
        %s205 = smul.u32 2, %s25
        %s206 = smul.u32 2, %s25
        %v207 = vld [vmem:[%s182] sm:$0xff]
        %v208 = vld [vmem:[%s182 + $0x8] sm:$0xff]
        %v209 = vld [vmem:[%s0] sm:$0xff]
        %v210 = vld [vmem:[%s1] sm:$0xff]
        %212 = vset.pattern.permute.xlu0 0
        %213 = vperm.xlu0 %212, %v210
        %v214 = vpop.permute.xlu0 %213
        %vm216 = vcmask 64512
        %v218 = vsel %vm216, %v209, 0
        %220 = vmatprep.subr.mxu0 %v208
        %221 = vmatpush1.msra.mxu0 %v207
        %222 = vmatprep.subr.mxu0 0.0
        %223 = vmatpush1.msra.mxu0 0.0
        %224 = vmatprep.subr.mxu0 0.0
        %225 = vmatpush1.msra.mxu0 0.0
        %226 = vmatprep.subr.mxu0 0.0
        %227 = vmatpush1.msra.mxu0 0.0
        %228 = vmatprep.subr.mxu0 0.0
        %229 = vmatpush1.msra.mxu0 0.0
        %230 = vmatprep.subr.mxu0 0.0
        %231 = vmatpush1.msra.mxu0 0.0
        %232 = vmatprep.subr.mxu0 0.0
        %233 = vmatpush1.msra.mxu0 0.0
        %234 = vmatprep.subr.mxu0 0.0
        %235 = vmatpush1.msra.mxu0 0.0
        %236 = vmatprep.subr.mxu0 0.0
        %237 = vmatpush1.msra.mxu0 0.0
        %238 = vmatprep.subr.mxu0 0.0
        %239 = vmatpush1.msra.mxu0 0.0
        %240 = vmatprep.subr.mxu0 0.0
        %241 = vmatpush1.msra.mxu0 0.0
        %242 = vmatprep.subr.mxu0 0.0
        %243 = vmatpush1.msra.mxu0 0.0
        %244 = vmatprep.subr.mxu0 0.0
        %245 = vmatpush1.msra.mxu0 0.0
        %246 = vmatprep.subr.mxu0 0.0
        %247 = vmatpush1.msra.mxu0 0.0
        %248 = vmatprep.subr.mxu0 0.0
        %249 = vmatpush1.msra.mxu0 0.0
        %250 = vmatprep.subr.mxu0 0.0
        %251 = vmatpush1.msra.mxu0 0.0
        %252 = vmatprep.subr.mxu0 0.0
        %253 = vmatpush1.msra.mxu0 0.0
        %254 = vmatprep.subr.mxu0 0.0
        %255 = vmatpush1.msra.mxu0 0.0
        %256 = vmatprep.subr.mxu0 0.0
        %257 = vmatpush1.msra.mxu0 0.0
        %258 = vmatprep.subr.mxu0 0.0
        %259 = vmatpush1.msra.mxu0 0.0
        %260 = vmatprep.subr.mxu0 0.0
        %261 = vmatpush1.msra.mxu0 0.0
        %262 = vmatprep.subr.mxu0 0.0
        %263 = vmatpush1.msra.mxu0 0.0
        %264 = vmatprep.subr.mxu0 0.0
        %265 = vmatpush1.msra.mxu0 0.0
        %266 = vmatprep.subr.mxu0 0.0
        %267 = vmatpush1.msra.mxu0 0.0
        %268 = vmatprep.subr.mxu0 0.0
        %269 = vmatpush1.msra.mxu0 0.0
        %270 = vmatprep.subr.mxu0 0.0
        %271 = vmatpush1.msra.mxu0 0.0
        %272 = vmatprep.subr.mxu0 0.0
        %273 = vmatpush1.msra.mxu0 0.0
        %274 = vmatprep.subr.mxu0 0.0
        %275 = vmatpush1.msra.mxu0 0.0
        %276 = vmatprep.subr.mxu0 0.0
        %277 = vmatpush1.msra.mxu0 0.0
        %278 = vmatprep.subr.mxu0 0.0
        %279 = vmatpush1.msra.mxu0 0.0
        %280 = vmatprep.subr.mxu0 0.0
        %281 = vmatpush1.msra.mxu0 0.0
        %282 = vmatprep.subr.mxu0 0.0
        %283 = vmatpush1.msra.mxu0 0.0
        %284 = vmatprep.mubr.f32.mxu0 0.0
        %285 = vmatmul.mubr.f32.gmra.mrb[0].mxu0 %v218
        %v286 = vpop.f32.mrb[0].mxu0
        %v287 = vadd.f32 %v214, %v286
        %v288 = vpop.f32.mrb[0].mxu0
        %v289 = vadd.f32 %v214, %v288
        %290 = vdwg.mxu0
        %v291 = vmax.f32 %v287, 0.0
        %v292 = vmax.f32 %v289, 0.0
        %s293 = scalar_lea.vmem %s0, 8
        %v294 = vld [vmem:[%s293] sm:$0xff]
        %s295 = scalar_lea.vmem %s1, 8
        %v296 = vld [vmem:[%s295] sm:$0xff]
        %298 = vset.pattern.permute.xlu0 0
        %299 = vperm.xlu0 %298, %v296
        %v300 = vpop.permute.xlu0 %299
        %v303 = vsel %vm216, %v294, 0
        %305 = vmatprep.subr.mxu0 %v292
        %306 = vmatpush1.msra.mxu0 %v291
        %307 = vmatprep.subr.mxu0 0.0
        %308 = vmatpush1.msra.mxu0 0.0
        %309 = vmatprep.subr.mxu0 0.0
        %310 = vmatpush1.msra.mxu0 0.0
        %311 = vmatprep.subr.mxu0 0.0
        %312 = vmatpush1.msra.mxu0 0.0
        %313 = vmatprep.subr.mxu0 0.0
        %314 = vmatpush1.msra.mxu0 0.0
        %315 = vmatprep.subr.mxu0 0.0
        %316 = vmatpush1.msra.mxu0 0.0
        %317 = vmatprep.subr.mxu0 0.0
        %318 = vmatpush1.msra.mxu0 0.0
        %319 = vmatprep.subr.mxu0 0.0
        %320 = vmatpush1.msra.mxu0 0.0
        %321 = vmatprep.subr.mxu0 0.0
        %322 = vmatpush1.msra.mxu0 0.0
        %323 = vmatprep.subr.mxu0 0.0
        %324 = vmatpush1.msra.mxu0 0.0
        %325 = vmatprep.subr.mxu0 0.0
        %326 = vmatpush1.msra.mxu0 0.0
        %327 = vmatprep.subr.mxu0 0.0
        %328 = vmatpush1.msra.mxu0 0.0
        %329 = vmatprep.subr.mxu0 0.0
        %330 = vmatpush1.msra.mxu0 0.0
        %331 = vmatprep.subr.mxu0 0.0
        %332 = vmatpush1.msra.mxu0 0.0
        %333 = vmatprep.subr.mxu0 0.0
        %334 = vmatpush1.msra.mxu0 0.0
        %335 = vmatprep.subr.mxu0 0.0
        %336 = vmatpush1.msra.mxu0 0.0
        %337 = vmatprep.subr.mxu0 0.0
        %338 = vmatpush1.msra.mxu0 0.0
        %339 = vmatprep.subr.mxu0 0.0
        %340 = vmatpush1.msra.mxu0 0.0
        %341 = vmatprep.subr.mxu0 0.0
        %342 = vmatpush1.msra.mxu0 0.0
        %343 = vmatprep.subr.mxu0 0.0
        %344 = vmatpush1.msra.mxu0 0.0
        %345 = vmatprep.subr.mxu0 0.0
        %346 = vmatpush1.msra.mxu0 0.0
        %347 = vmatprep.subr.mxu0 0.0
        %348 = vmatpush1.msra.mxu0 0.0
        %349 = vmatprep.subr.mxu0 0.0
        %350 = vmatpush1.msra.mxu0 0.0
        %351 = vmatprep.subr.mxu0 0.0
        %352 = vmatpush1.msra.mxu0 0.0
        %353 = vmatprep.subr.mxu0 0.0
        %354 = vmatpush1.msra.mxu0 0.0
        %355 = vmatprep.subr.mxu0 0.0
        %356 = vmatpush1.msra.mxu0 0.0
        %357 = vmatprep.subr.mxu0 0.0
        %358 = vmatpush1.msra.mxu0 0.0
        %359 = vmatprep.subr.mxu0 0.0
        %360 = vmatpush1.msra.mxu0 0.0
        %361 = vmatprep.subr.mxu0 0.0
        %362 = vmatpush1.msra.mxu0 0.0
        %363 = vmatprep.subr.mxu0 0.0
        %364 = vmatpush1.msra.mxu0 0.0
        %365 = vmatprep.subr.mxu0 0.0
        %366 = vmatpush1.msra.mxu0 0.0
        %367 = vmatprep.subr.mxu0 0.0
        %368 = vmatpush1.msra.mxu0 0.0
        %369 = vmatprep.mubr.f32.mxu0 0.0
        %370 = vmatmul.mubr.f32.gmra.mrb[0].mxu0 %v303
        %v371 = vpop.f32.mrb[0].mxu0
        %v372 = vadd.f32 %v300, %v371
        %v373 = vpop.f32.mrb[0].mxu0
        %v374 = vadd.f32 %v300, %v373
        %375 = vdwg.mxu0
        %v376 = vmax.f32 %v372, 0.0
        %v377 = vmax.f32 %v374, 0.0
        %s378 = scalar_lea.vmem %s0, 16
        %v379 = vld [vmem:[%s378] sm:$0xff]
        %s380 = scalar_lea.vmem %s1, 16
        %v381 = vld [vmem:[%s380] sm:$0xff]
        %383 = vset.pattern.permute.xlu0 0
        %384 = vperm.xlu0 %383, %v381
        %v385 = vpop.permute.xlu0 %384
        %v388 = vsel %vm216, %v379, 0
        %390 = vmatprep.subr.mxu0 %v377
        %391 = vmatpush1.msra.mxu0 %v376
        %392 = vmatprep.subr.mxu0 0.0
        %393 = vmatpush1.msra.mxu0 0.0
        %394 = vmatprep.subr.mxu0 0.0
        %395 = vmatpush1.msra.mxu0 0.0
        %396 = vmatprep.subr.mxu0 0.0
        %397 = vmatpush1.msra.mxu0 0.0
        %398 = vmatprep.subr.mxu0 0.0
        %399 = vmatpush1.msra.mxu0 0.0
        %400 = vmatprep.subr.mxu0 0.0
        %401 = vmatpush1.msra.mxu0 0.0
        %402 = vmatprep.subr.mxu0 0.0
        %403 = vmatpush1.msra.mxu0 0.0
        %404 = vmatprep.subr.mxu0 0.0
        %405 = vmatpush1.msra.mxu0 0.0
        %406 = vmatprep.subr.mxu0 0.0
        %407 = vmatpush1.msra.mxu0 0.0
        %408 = vmatprep.subr.mxu0 0.0
        %409 = vmatpush1.msra.mxu0 0.0
        %410 = vmatprep.subr.mxu0 0.0
        %411 = vmatpush1.msra.mxu0 0.0
        %412 = vmatprep.subr.mxu0 0.0
        %413 = vmatpush1.msra.mxu0 0.0
        %414 = vmatprep.subr.mxu0 0.0
        %415 = vmatpush1.msra.mxu0 0.0
        %416 = vmatprep.subr.mxu0 0.0
        %417 = vmatpush1.msra.mxu0 0.0
        %418 = vmatprep.subr.mxu0 0.0
        %419 = vmatpush1.msra.mxu0 0.0
        %420 = vmatprep.subr.mxu0 0.0
        %421 = vmatpush1.msra.mxu0 0.0
        %422 = vmatprep.subr.mxu0 0.0
        %423 = vmatpush1.msra.mxu0 0.0
        %424 = vmatprep.subr.mxu0 0.0
        %425 = vmatpush1.msra.mxu0 0.0
        %426 = vmatprep.subr.mxu0 0.0
        %427 = vmatpush1.msra.mxu0 0.0
        %428 = vmatprep.subr.mxu0 0.0
        %429 = vmatpush1.msra.mxu0 0.0
        %430 = vmatprep.subr.mxu0 0.0
        %431 = vmatpush1.msra.mxu0 0.0
        %432 = vmatprep.subr.mxu0 0.0
        %433 = vmatpush1.msra.mxu0 0.0
        %434 = vmatprep.subr.mxu0 0.0
        %435 = vmatpush1.msra.mxu0 0.0
        %436 = vmatprep.subr.mxu0 0.0
        %437 = vmatpush1.msra.mxu0 0.0
        %438 = vmatprep.subr.mxu0 0.0
        %439 = vmatpush1.msra.mxu0 0.0
        %440 = vmatprep.subr.mxu0 0.0
        %441 = vmatpush1.msra.mxu0 0.0
        %442 = vmatprep.subr.mxu0 0.0
        %443 = vmatpush1.msra.mxu0 0.0
        %444 = vmatprep.subr.mxu0 0.0
        %445 = vmatpush1.msra.mxu0 0.0
        %446 = vmatprep.subr.mxu0 0.0
        %447 = vmatpush1.msra.mxu0 0.0
        %448 = vmatprep.subr.mxu0 0.0
        %449 = vmatpush1.msra.mxu0 0.0
        %450 = vmatprep.subr.mxu0 0.0
        %451 = vmatpush1.msra.mxu0 0.0
        %452 = vmatprep.subr.mxu0 0.0
        %453 = vmatpush1.msra.mxu0 0.0
        %454 = vmatprep.mubr.f32.mxu0 0.0
        %455 = vmatmul.mubr.f32.gmra.mrb[0].mxu0 %v388
        %v456 = vpop.f32.mrb[0].mxu0
        %v457 = vadd.f32 %v385, %v456
        %v458 = vpop.f32.mrb[0].mxu0
        %v459 = vadd.f32 %v385, %v458
        %460 = vdwg.mxu0
        %v461 = vmax.f32 %v457, 0.0
        %v462 = vmax.f32 %v459, 0.0
        %v463 = vadd.f32 %v461, %v207
        %v464 = vadd.f32 %v462, %v208
        %s465 = scalar_lea.vmem %s0, 24
        %v466 = vld [vmem:[%s465] sm:$0xff]
        %s467 = scalar_lea.vmem %s1, 24
        %v468 = vld [vmem:[%s467] sm:$0xff]
        %470 = vset.pattern.permute.xlu0 0
        %471 = vperm.xlu0 %470, %v468
        %v472 = vpop.permute.xlu0 %471
        %v475 = vsel %vm216, %v466, 0
        %477 = vmatprep.subr.mxu0 %v464
        %478 = vmatpush1.msra.mxu0 %v463
        %479 = vmatprep.subr.mxu0 0.0
        %480 = vmatpush1.msra.mxu0 0.0
        %481 = vmatprep.subr.mxu0 0.0
        %482 = vmatpush1.msra.mxu0 0.0
        %483 = vmatprep.subr.mxu0 0.0
        %484 = vmatpush1.msra.mxu0 0.0
        %485 = vmatprep.subr.mxu0 0.0
        %486 = vmatpush1.msra.mxu0 0.0
        %487 = vmatprep.subr.mxu0 0.0
        %488 = vmatpush1.msra.mxu0 0.0
        %489 = vmatprep.subr.mxu0 0.0
        %490 = vmatpush1.msra.mxu0 0.0
        %491 = vmatprep.subr.mxu0 0.0
        %492 = vmatpush1.msra.mxu0 0.0
        %493 = vmatprep.subr.mxu0 0.0
        %494 = vmatpush1.msra.mxu0 0.0
        %495 = vmatprep.subr.mxu0 0.0
        %496 = vmatpush1.msra.mxu0 0.0
        %497 = vmatprep.subr.mxu0 0.0
        %498 = vmatpush1.msra.mxu0 0.0
        %499 = vmatprep.subr.mxu0 0.0
        %500 = vmatpush1.msra.mxu0 0.0
        %501 = vmatprep.subr.mxu0 0.0
        %502 = vmatpush1.msra.mxu0 0.0
        %503 = vmatprep.subr.mxu0 0.0
        %504 = vmatpush1.msra.mxu0 0.0
        %505 = vmatprep.subr.mxu0 0.0
        %506 = vmatpush1.msra.mxu0 0.0
        %507 = vmatprep.subr.mxu0 0.0
        %508 = vmatpush1.msra.mxu0 0.0
        %509 = vmatprep.subr.mxu0 0.0
        %510 = vmatpush1.msra.mxu0 0.0
        %511 = vmatprep.subr.mxu0 0.0
        %512 = vmatpush1.msra.mxu0 0.0
        %513 = vmatprep.subr.mxu0 0.0
        %514 = vmatpush1.msra.mxu0 0.0
        %515 = vmatprep.subr.mxu0 0.0
        %516 = vmatpush1.msra.mxu0 0.0
        %517 = vmatprep.subr.mxu0 0.0
        %518 = vmatpush1.msra.mxu0 0.0
        %519 = vmatprep.subr.mxu0 0.0
        %520 = vmatpush1.msra.mxu0 0.0
        %521 = vmatprep.subr.mxu0 0.0
        %522 = vmatpush1.msra.mxu0 0.0
        %523 = vmatprep.subr.mxu0 0.0
        %524 = vmatpush1.msra.mxu0 0.0
        %525 = vmatprep.subr.mxu0 0.0
        %526 = vmatpush1.msra.mxu0 0.0
        %527 = vmatprep.subr.mxu0 0.0
        %528 = vmatpush1.msra.mxu0 0.0
        %529 = vmatprep.subr.mxu0 0.0
        %530 = vmatpush1.msra.mxu0 0.0
        %531 = vmatprep.subr.mxu0 0.0
        %532 = vmatpush1.msra.mxu0 0.0
        %533 = vmatprep.subr.mxu0 0.0
        %534 = vmatpush1.msra.mxu0 0.0
        %535 = vmatprep.subr.mxu0 0.0
        %536 = vmatpush1.msra.mxu0 0.0
        %537 = vmatprep.subr.mxu0 0.0
        %538 = vmatpush1.msra.mxu0 0.0
        %539 = vmatprep.subr.mxu0 0.0
        %540 = vmatpush1.msra.mxu0 0.0
        %541 = vmatprep.mubr.f32.mxu0 0.0
        %542 = vmatmul.mubr.f32.gmra.mrb[0].mxu0 %v475
        %v543 = vpop.f32.mrb[0].mxu0
        %v544 = vadd.f32 %v472, %v543
        %v545 = vpop.f32.mrb[0].mxu0
        %v546 = vadd.f32 %v472, %v545
        %547 = vdwg.mxu0
        %v548 = vmax.f32 %v544, 0.0
        %v549 = vmax.f32 %v546, 0.0
        %s550 = scalar_lea.vmem %s0, 32
        %v551 = vld [vmem:[%s550] sm:$0xff]
        %s552 = scalar_lea.vmem %s1, 32
        %v553 = vld [vmem:[%s552] sm:$0xff]
        %555 = vset.pattern.permute.xlu0 0
        %556 = vperm.xlu0 %555, %v553
        %v557 = vpop.permute.xlu0 %556
        %v560 = vsel %vm216, %v551, 0
        %562 = vmatprep.subr.mxu0 %v549
        %563 = vmatpush1.msra.mxu0 %v548
        %564 = vmatprep.subr.mxu0 0.0
        %565 = vmatpush1.msra.mxu0 0.0
        %566 = vmatprep.subr.mxu0 0.0
        %567 = vmatpush1.msra.mxu0 0.0
        %568 = vmatprep.subr.mxu0 0.0
        %569 = vmatpush1.msra.mxu0 0.0
        %570 = vmatprep.subr.mxu0 0.0
        %571 = vmatpush1.msra.mxu0 0.0
        %572 = vmatprep.subr.mxu0 0.0
        %573 = vmatpush1.msra.mxu0 0.0
        %574 = vmatprep.subr.mxu0 0.0
        %575 = vmatpush1.msra.mxu0 0.0
        %576 = vmatprep.subr.mxu0 0.0
        %577 = vmatpush1.msra.mxu0 0.0
        %578 = vmatprep.subr.mxu0 0.0
        %579 = vmatpush1.msra.mxu0 0.0
        %580 = vmatprep.subr.mxu0 0.0
        %581 = vmatpush1.msra.mxu0 0.0
        %582 = vmatprep.subr.mxu0 0.0
        %583 = vmatpush1.msra.mxu0 0.0
        %584 = vmatprep.subr.mxu0 0.0
        %585 = vmatpush1.msra.mxu0 0.0
        %586 = vmatprep.subr.mxu0 0.0
        %587 = vmatpush1.msra.mxu0 0.0
        %588 = vmatprep.subr.mxu0 0.0
        %589 = vmatpush1.msra.mxu0 0.0
        %590 = vmatprep.subr.mxu0 0.0
        %591 = vmatpush1.msra.mxu0 0.0
        %592 = vmatprep.subr.mxu0 0.0
        %593 = vmatpush1.msra.mxu0 0.0
        %594 = vmatprep.subr.mxu0 0.0
        %595 = vmatpush1.msra.mxu0 0.0
        %596 = vmatprep.subr.mxu0 0.0
        %597 = vmatpush1.msra.mxu0 0.0
        %598 = vmatprep.subr.mxu0 0.0
        %599 = vmatpush1.msra.mxu0 0.0
        %600 = vmatprep.subr.mxu0 0.0
        %601 = vmatpush1.msra.mxu0 0.0
        %602 = vmatprep.subr.mxu0 0.0
        %603 = vmatpush1.msra.mxu0 0.0
        %604 = vmatprep.subr.mxu0 0.0
        %605 = vmatpush1.msra.mxu0 0.0
        %606 = vmatprep.subr.mxu0 0.0
        %607 = vmatpush1.msra.mxu0 0.0
        %608 = vmatprep.subr.mxu0 0.0
        %609 = vmatpush1.msra.mxu0 0.0
        %610 = vmatprep.subr.mxu0 0.0
        %611 = vmatpush1.msra.mxu0 0.0
        %612 = vmatprep.subr.mxu0 0.0
        %613 = vmatpush1.msra.mxu0 0.0
        %614 = vmatprep.subr.mxu0 0.0
        %615 = vmatpush1.msra.mxu0 0.0
        %616 = vmatprep.subr.mxu0 0.0
        %617 = vmatpush1.msra.mxu0 0.0
        %618 = vmatprep.subr.mxu0 0.0
        %619 = vmatpush1.msra.mxu0 0.0
        %620 = vmatprep.subr.mxu0 0.0
        %621 = vmatpush1.msra.mxu0 0.0
        %622 = vmatprep.subr.mxu0 0.0
        %623 = vmatpush1.msra.mxu0 0.0
        %624 = vmatprep.subr.mxu0 0.0
        %625 = vmatpush1.msra.mxu0 0.0
        %626 = vmatprep.mubr.f32.mxu0 0.0
        %627 = vmatmul.mubr.f32.gmra.mrb[0].mxu0 %v560
        %v628 = vpop.f32.mrb[0].mxu0
        %v629 = vadd.f32 %v557, %v628
        %v630 = vpop.f32.mrb[0].mxu0
        %v631 = vadd.f32 %v557, %v630
        %632 = vdwg.mxu0
        %v633 = vmax.f32 %v629, 0.0
        %v634 = vmax.f32 %v631, 0.0
        %s635 = scalar_lea.vmem %s0, 40
        %v636 = vld [vmem:[%s635] sm:$0xff]
        %s637 = scalar_lea.vmem %s1, 40
        %v638 = vld [vmem:[%s637] sm:$0xff]
        %640 = vset.pattern.permute.xlu0 0
        %641 = vperm.xlu0 %640, %v638
        %v642 = vpop.permute.xlu0 %641
        %v645 = vsel %vm216, %v636, 0
        %647 = vmatprep.subr.mxu0 %v634
        %648 = vmatpush1.msra.mxu0 %v633
        %649 = vmatprep.subr.mxu0 0.0
        %650 = vmatpush1.msra.mxu0 0.0
        %651 = vmatprep.subr.mxu0 0.0
        %652 = vmatpush1.msra.mxu0 0.0
        %653 = vmatprep.subr.mxu0 0.0
        %654 = vmatpush1.msra.mxu0 0.0
        %655 = vmatprep.subr.mxu0 0.0
        %656 = vmatpush1.msra.mxu0 0.0
        %657 = vmatprep.subr.mxu0 0.0
        %658 = vmatpush1.msra.mxu0 0.0
        %659 = vmatprep.subr.mxu0 0.0
        %660 = vmatpush1.msra.mxu0 0.0
        %661 = vmatprep.subr.mxu0 0.0
        %662 = vmatpush1.msra.mxu0 0.0
        %663 = vmatprep.subr.mxu0 0.0
        %664 = vmatpush1.msra.mxu0 0.0
        %665 = vmatprep.subr.mxu0 0.0
        %666 = vmatpush1.msra.mxu0 0.0
        %667 = vmatprep.subr.mxu0 0.0
        %668 = vmatpush1.msra.mxu0 0.0
        %669 = vmatprep.subr.mxu0 0.0
        %670 = vmatpush1.msra.mxu0 0.0
        %671 = vmatprep.subr.mxu0 0.0
        %672 = vmatpush1.msra.mxu0 0.0
        %673 = vmatprep.subr.mxu0 0.0
        %674 = vmatpush1.msra.mxu0 0.0
        %675 = vmatprep.subr.mxu0 0.0
        %676 = vmatpush1.msra.mxu0 0.0
        %677 = vmatprep.subr.mxu0 0.0
        %678 = vmatpush1.msra.mxu0 0.0
        %679 = vmatprep.subr.mxu0 0.0
        %680 = vmatpush1.msra.mxu0 0.0
        %681 = vmatprep.subr.mxu0 0.0
        %682 = vmatpush1.msra.mxu0 0.0
        %683 = vmatprep.subr.mxu0 0.0
        %684 = vmatpush1.msra.mxu0 0.0
        %685 = vmatprep.subr.mxu0 0.0
        %686 = vmatpush1.msra.mxu0 0.0
        %687 = vmatprep.subr.mxu0 0.0
        %688 = vmatpush1.msra.mxu0 0.0
        %689 = vmatprep.subr.mxu0 0.0
        %690 = vmatpush1.msra.mxu0 0.0
        %691 = vmatprep.subr.mxu0 0.0
        %692 = vmatpush1.msra.mxu0 0.0
        %693 = vmatprep.subr.mxu0 0.0
        %694 = vmatpush1.msra.mxu0 0.0
        %695 = vmatprep.subr.mxu0 0.0
        %696 = vmatpush1.msra.mxu0 0.0
        %697 = vmatprep.subr.mxu0 0.0
        %698 = vmatpush1.msra.mxu0 0.0
        %699 = vmatprep.subr.mxu0 0.0
        %700 = vmatpush1.msra.mxu0 0.0
        %701 = vmatprep.subr.mxu0 0.0
        %702 = vmatpush1.msra.mxu0 0.0
        %703 = vmatprep.subr.mxu0 0.0
        %704 = vmatpush1.msra.mxu0 0.0
        %705 = vmatprep.subr.mxu0 0.0
        %706 = vmatpush1.msra.mxu0 0.0
        %707 = vmatprep.subr.mxu0 0.0
        %708 = vmatpush1.msra.mxu0 0.0
        %709 = vmatprep.subr.mxu0 0.0
        %710 = vmatpush1.msra.mxu0 0.0
        %711 = vmatprep.mubr.f32.mxu0 0.0
        %712 = vmatmul.mubr.f32.gmra.mrb[0].mxu0 %v645
        %v713 = vpop.f32.mrb[0].mxu0
        %v714 = vadd.f32 %v642, %v713
        %v715 = vpop.f32.mrb[0].mxu0
        %v716 = vadd.f32 %v642, %v715
        %717 = vdwg.mxu0
        %v718 = vmax.f32 %v714, 0.0
        %v719 = vmax.f32 %v716, 0.0
        %v720 = vadd.f32 %v718, %v463
        %v721 = vadd.f32 %v719, %v464
        %722 = vst [vmem:[%s204] sm:$0xff] %v720
        %723 = vst [vmem:[%s204 + $0x8] sm:$0xff] %v721
        %s724 = sand.u32 %s112, 1
        %s725 = scalar_lea.sflag [#allocation4], %s724
        %s726 = sand.u32 %s112, 1
        %s727 = smul.addr %s726, 16
        %s728 = scalar_lea.vmem [#allocation5], %s727
        // Predicated region
        $region37: #{tpu_custom_call.1} parent=31 // pred_check
          %p729 = pneg %p122
        $region38: #{tpu_custom_call.1} parent=31 // pred_check_branch
          %731 = sbr.rel (%p729) target = $region40
        $region39: #{tpu_custom_call.1} parent=31 // pred_region
          %s732 = smul.u32 2, %s25
          %s734 = ssub.s32 256, 256
          %735 = vsyncadd %s725, %s734
          %s736 = smul.addr %s24, 2
          %s737 = sadd.s32 %s732, %s736
          %s738 = smul.addr %s737, 128
          %s739 = scalar_lea.hbm %s3, %s738
          %s741 = sshll.u32 %s728, 4
          %s742 = int_to_ptr.vmem [resolvable:$true] %s741
          %744 = dma.vmem_to_hbm [thread:$0]  %s742, 256, %s739, %s725
        $region40: #{tpu_custom_call.1} parent=31 // pred_fallthru
          _
      $region32: #{tpu_custom_call.1} parent=5 // pred_fallthru
        _
      %p745 = scmp.le.s32.totalorder 2, %s15
      // Predicated region
      $region41: #{tpu_custom_call.1} parent=5 // pred_check
        %p746 = pneg %p745
      $region42: #{tpu_custom_call.1} parent=5 // pred_check_branch
        %748 = sbr.rel (%p746) target = $region44
      $region43: #{tpu_custom_call.1} parent=5 // pred_region
        %s749 = ssub.s32 %s15, 2
        // Predicated region
        $region45: #{tpu_custom_call.1} parent=43 // pred_check
          %p750 = pneg %p128
        $region46: #{tpu_custom_call.1} parent=43 // pred_check_branch
          %752 = sbr.rel (%p750) target = $region48
        $region47: #{tpu_custom_call.1} parent=43 // pred_region
          %s753 = sand.u32 %s113, 1
          %s754 = scalar_lea.sflag [#allocation4], %s753
          %s755 = sand.u32 %s113, 1
          %s756 = smul.addr %s755, 16
          %s757 = scalar_lea.vmem [#allocation5], %s756
          %758 = dma.done %s754, 256
        $region48: #{tpu_custom_call.1} parent=43 // pred_fallthru
          _
      $region44: #{tpu_custom_call.1} parent=5 // pred_fallthru
        _
    $region6: #{tpu_custom_call.1} parent=1 // loop_footer
      %s19 = sadd.s32 1, %s15
    $region7: #{tpu_custom_call.1} parent=1 // loop_footer_branch
      %14 = sbr.rel target = $region3
    $region8: #{tpu_custom_call.1} parent=1 // loop_exit
      _
    %759 = vsyncpa [#allocation3], 1
    %s760 = scalar_lea.sflag [#allocation3], 1
    %761 = vsyncpa %s760, 1
    %762 = vsyncpa [#allocation4], 1
    %s763 = scalar_lea.sflag [#allocation4], 1
    %764 = vsyncpa %s763, 1

</llo_original>
